<compile_context>
chip_gen: v7x
topology: tpu7x:2x2x1
jax: 0.10.0
libtpu: 0.0.40
codegen_flags: <defaults>
</compile_context>

<pallas_src>
import functools

import jax
import jax.numpy as jnp
import numpy as np
from jax.experimental import pallas as pl
from jax.experimental.pallas import tpu as pltpu  # noqa: F401  (gridless launch; no TPU-specific params needed)


# ----------------------------------------------------------------------------
# Fused Pallas kernel: one-hot embedding -> LSTM (unrolled) -> linear -> softmax
# ----------------------------------------------------------------------------
def _policy_kernel(tok_ref, emb_ref, wih_ref, whh_ref, b_ref, wout_ref,
                   bout_ref, probs_ref, logits_ref, h_ref, c_ref,
                   *, T, Bp, Hp):
    C = emb_ref.shape[0]

    # ---- embedding gather via one-hot matmul (MXU) --------------------------
    ids = tok_ref[...]                                            # (T*Bp, 1) i32
    iota = jax.lax.broadcasted_iota(jnp.int32, (T * Bp, C), 1)    # (T*Bp, C)
    onehot = (iota == ids).astype(jnp.float32)                    # (T*Bp, C)
    x_em = jnp.dot(onehot, emb_ref[...],
                   preferred_element_type=jnp.float32)            # (T*Bp, E)

    # ---- time-invariant input projection hoisted out of the recurrence ------
    # x_proj[t*Bp + b, :] = x_em[t, b] @ W_ih^T (gate-padded)  +  (b_ih + b_hh)
    x_proj = jnp.dot(x_em, wih_ref[...],
                     preferred_element_type=jnp.float32) + b_ref[...]  # (T*Bp, 4Hp)

    # ---- LSTM recurrence, fully unrolled, state kept in vregs ---------------
    h = jnp.zeros((Bp, Hp), jnp.float32)
    c = jnp.zeros((Bp, Hp), jnp.float32)
    for t in range(T):  # static T -> fully unrolled (== fori_loop unroll=True)
        gates = x_proj[t * Bp:(t + 1) * Bp, :] + jnp.dot(
            h, whh_ref[...], preferred_element_type=jnp.float32)  # (Bp, 4Hp)
        # each gate occupies its own 128-lane block -> vreg-aligned slices
        i_g = jax.nn.sigmoid(gates[:, 0 * Hp:1 * Hp])
        f_g = jax.nn.sigmoid(gates[:, 1 * Hp:2 * Hp])
        g_g = jnp.tanh(gates[:, 2 * Hp:3 * Hp])
        o_g = jax.nn.sigmoid(gates[:, 3 * Hp:4 * Hp])
        c = f_g * c + i_g * g_g
        h = o_g * jnp.tanh(c)

    # ---- output head: logits + softmax (fused) -------------------------------
    logits = jnp.dot(h, wout_ref[...],
                     preferred_element_type=jnp.float32) + bout_ref[...]  # (Bp, C)
    m = jnp.max(logits, axis=1, keepdims=True)
    e = jnp.exp(logits - m)
    s = jnp.sum(e, axis=1, keepdims=True)
    r = pl.reciprocal(s, approx=True)
    r = r * (2.0 - s * r)            # one Newton step -> ~f32-accurate 1/s
    probs = e * r

    probs_ref[...] = probs
    logits_ref[...] = logits
    h_ref[...] = h
    c_ref[...] = c


def _policy_pallas(kp, tok_ids, T, Bp):
    Hp, C = kp["Hp"], kp["C"]
    E = kp["emb"].shape[1]
    kernel = functools.partial(_policy_kernel, T=T, Bp=Bp, Hp=Hp)
    return pl.pallas_call(
        kernel,
        out_shape=(jax.ShapeDtypeStruct((Bp, C), jnp.float32),   # probs
                   jax.ShapeDtypeStruct((Bp, C), jnp.float32),   # logits
                   jax.ShapeDtypeStruct((Bp, Hp), jnp.float32),  # h (padded)
                   jax.ShapeDtypeStruct((Bp, Hp), jnp.float32)), # c (padded)
        in_specs=[
            pl.BlockSpec((T * Bp, 1), lambda: (0, 0)),
            pl.BlockSpec((C, E), lambda: (0, 0)),
            pl.BlockSpec((E, 4 * Hp), lambda: (0, 0)),
            pl.BlockSpec((Hp, 4 * Hp), lambda: (0, 0)),
            pl.BlockSpec((1, 4 * Hp), lambda: (0, 0)),
            pl.BlockSpec((Hp, C), lambda: (0, 0)),
            pl.BlockSpec((1, C), lambda: (0, 0)),
        ],
        out_specs=(pl.BlockSpec((Bp, C), lambda: (0, 0)),
                   pl.BlockSpec((Bp, C), lambda: (0, 0)),
                   pl.BlockSpec((Bp, Hp), lambda: (0, 0)),
                   pl.BlockSpec((Bp, Hp), lambda: (0, 0))),
    )(tok_ids, kp["emb"], kp["w_ih"], kp["w_hh"], kp["b"], kp["w_out"],
      kp["b_out"])


# ----------------------------------------------------------------------------
# Policy forward (glue: batch padding, sampling)
# ----------------------------------------------------------------------------
def policy_forward(kparams, tokens, seq_len, recom, key, evaluate=False):
    """tokens: (T, B) int32 ids. Returns (output, indices, (h, c))."""
    # TODO(synk): seq_len / packed variable-length sequences not implemented;
    # all sequences are treated as full length T (matches full-length usage).
    del seq_len
    T, B = tokens.shape
    H = kparams["H"]
    Bp = ((B + 7) // 8) * 8                       # sublane-dense batch

    tok_p = jnp.pad(tokens.astype(jnp.int32), ((0, 0), (0, Bp - B)))
    tok_ids = tok_p.reshape(T * Bp, 1)            # row t*Bp + b <-> (t, b)

    probs_p, logits_p, h_p, c_p = _policy_pallas(kparams, tok_ids, T, Bp)

    probs = probs_p[:B]
    logits = logits_p[:B]
    h = h_p[:B, :H]
    c = c_p[:B, :H]

    if evaluate:
        _, indices = jax.lax.top_k(probs, recom)
    else:
        # torch.multinomial(softmax(logits), recom) without replacement
        # == Gumbel top-k applied directly to the logits.
        g = -jnp.log(-jnp.log(
            jax.random.uniform(key, logits.shape, minval=1e-20, maxval=1.0)))
        _, indices = jax.lax.top_k(logits + g, recom)
    return probs, indices, (h, c)


# ----------------------------------------------------------------------------
# Parameter construction (PyTorch layout) and kernel packing (padded layout)
# ----------------------------------------------------------------------------
def make_params(key, numlabel, embed_dim, encod_dim):
    E, H, C = embed_dim, encod_dim, numlabel
    ks = jax.random.split(key, 7)
    k_lstm = 1.0 / np.sqrt(H)
    u = lambda k, shape, s: jax.random.uniform(k, shape, jnp.float32, -s, s)
    return {
        "embedding": jax.random.normal(ks[6], (C, E), jnp.float32),  # EmbeddingLayer
        "w_ih": u(ks[0], (4 * H, E), k_lstm),     # nn.LSTM weight_ih_l0 (i,f,g,o)
        "w_hh": u(ks[1], (4 * H, H), k_lstm),     # weight_hh_l0
        "b_ih": u(ks[2], (4 * H,), k_lstm),
        "b_hh": u(ks[3], (4 * H,), k_lstm),
        "w_out": u(ks[4], (C, H), 1.0 / np.sqrt(H)),  # nn.Linear(enc_lstm_dim, C)
        "b_out": u(ks[5], (C,), 1.0 / np.sqrt(H)),
    }


def pack_params(raw, lane=128):
    """Transpose + pad weights so each LSTM gate owns a full 128-lane block."""
    emb = jnp.asarray(raw["embedding"], jnp.float32)          # (C, E)
    C, E = emb.shape
    H = raw["w_hh"].shape[1]
    Hp = ((H + lane - 1) // lane) * lane

    w_ih_t = np.asarray(raw["w_ih"], np.float32).T            # (E, 4H)
    w_hh_t = np.asarray(raw["w_hh"], np.float32).T            # (H, 4H)
    b = np.asarray(raw["b_ih"] + raw["b_hh"], np.float32)[None, :]  # (1, 4H)

    def pad_gate_cols(w, n_rows):
        out = np.zeros((n_rows, 4 * Hp), np.float32)
        r = w.shape[0]
        for g in range(4):
            out[:r, g * Hp:g * Hp + H] = w[:, g * H:(g + 1) * H]
        return jnp.asarray(out)

    w_out_p = np.zeros((Hp, C), np.float32)
    w_out_p[:H, :] = np.asarray(raw["w_out"], np.float32).T

    return {
        "emb": emb,
        "w_ih": pad_gate_cols(w_ih_t, E),                     # (E, 4Hp)
        "w_hh": pad_gate_cols(w_hh_t, Hp),                    # (Hp, 4Hp), zero rows H:
        "b": pad_gate_cols(b, 1),                             # (1, 4Hp)
        "w_out": jnp.asarray(w_out_p),                        # (Hp, C), zero rows H:
        "b_out": jnp.asarray(raw["b_out"], jnp.float32)[None, :],  # (1, C)
        "H": int(H), "Hp": int(Hp), "C": int(C), "E": int(E),
    }


# ----------------------------------------------------------------------------
# Pure-JAX reference (correctness check only)
# ----------------------------------------------------------------------------
def ref_forward(raw, tokens):
    x = raw["embedding"][tokens]                 # (T, B, E)
    H = raw["w_hh"].shape[1]
    B = tokens.shape[1]
    w_ih_t, w_hh_t = raw["w_ih"].T, raw["w_hh"].T
    b = raw["b_ih"] + raw["b_hh"]

    def step(carry, x_t):
        h, c = carry
        gates = x_t @ w_ih_t + h @ w_hh_t + b
        i, f, g, o = jnp.split(gates, 4, axis=1)
        i = jax.nn.sigmoid(i); f = jax.nn.sigmoid(f)
        g = jnp.tanh(g); o = jax.nn.sigmoid(o)
        c = f * c + i * g
        h = o * jnp.tanh(c)
        return (h, c), None

    (h, c), _ = jax.lax.scan(step, (jnp.zeros((B, H)), jnp.zeros((B, H))), x)
    logits = h @ raw["w_out"].T + raw["b_out"]
    return jax.nn.softmax(logits, axis=1), h, c


# ----------------------------------------------------------------------------
if __name__ == "__main__":
    # Small shapes consistent with the module.
    bsize, embed_dim, encod_dim, numlabel, recom = 4, 32, 32, 128, 50
    T = 8

    key = jax.random.PRNGKey(0)
    k_par, k_tok, k_samp = jax.random.split(key, 3)
    raw = make_params(k_par, numlabel, embed_dim, encod_dim)
    kparams = pack_params(raw)

    tokens = jax.random.randint(k_tok, (T, bsize), 0, numlabel, jnp.int32)
    seq_len = jnp.full((bsize,), T, jnp.int32)

    output, indices, (h, c) = policy_forward(
        kparams, tokens, seq_len, recom, k_samp, evaluate=False)
    output = jax.block_until_ready(output)
    indices = jax.block_until_ready(indices)

    # Correctness check against pure-JAX reference.
    ref_out, ref_h, ref_c = ref_forward(raw, tokens)
    np.testing.assert_allclose(np.asarray(h), np.asarray(ref_h),
                               rtol=1e-5, atol=1e-5)
    np.testing.assert_allclose(np.asarray(c), np.asarray(ref_c),
                               rtol=1e-5, atol=1e-5)
    np.testing.assert_allclose(np.asarray(output), np.asarray(ref_out),
                               rtol=1e-4, atol=1e-5)
    assert output.shape == (bsize, numlabel)
    assert indices.shape == (bsize, recom)
    assert bool(jnp.all((indices >= 0) & (indices < numlabel)))

    print("KERNEL_OK")
</pallas_src>

<mosaic_0001>
module attributes {stable_mosaic.version = 11 : i64} {
  func.func @_policy_kernel(%arg0: memref<64x1xi32, #tpu.memory_space<vmem>>, %arg1: memref<128x32xf32, #tpu.memory_space<vmem>>, %arg2: memref<32x512xf32, #tpu.memory_space<vmem>>, %arg3: memref<128x512xf32, #tpu.memory_space<vmem>>, %arg4: memref<1x512xf32, #tpu.memory_space<vmem>>, %arg5: memref<128x128xf32, #tpu.memory_space<vmem>>, %arg6: memref<1x128xf32, #tpu.memory_space<vmem>>, %arg7: memref<8x128xf32, #tpu.memory_space<vmem>>, %arg8: memref<8x128xf32, #tpu.memory_space<vmem>>, %arg9: memref<8x128xf32, #tpu.memory_space<vmem>>, %arg10: memref<8x128xf32, #tpu.memory_space<vmem>>) attributes {dimension_semantics = [], scalar_prefetch = 0 : i64, scratch_operands = 0 : i64, tpu.core_type = #tpu.core_type<tc>} {
    %c0 = arith.constant 0 : index
    %c0_0 = arith.constant 0 : index
    %0 = vector.load %arg0[%c0, %c0_0] : memref<64x1xi32, #tpu.memory_space<vmem>>, vector<64x1xi32>
    %1 = tpu.iota {dimensions = array<i32: 1>} : vector<64x128xi32>
    %2 = vector.broadcast %0 : vector<64x1xi32> to vector<64x128xi32>
    %3 = arith.cmpi eq, %1, %2 : vector<64x128xi32>
    %4 = arith.extui %3 : vector<64x128xi1> to vector<64x128xi32>
    %5 = arith.sitofp %4 : vector<64x128xi32> to vector<64x128xf32>
    %c0_1 = arith.constant 0 : index
    %c0_2 = arith.constant 0 : index
    %6 = vector.load %arg1[%c0_1, %c0_2] : memref<128x32xf32, #tpu.memory_space<vmem>>, vector<128x32xf32>
    %cst = arith.constant dense<0.000000e+00> : vector<64x32xf32>
    %7 = tpu.matmul %5, %6, %cst {dimension_numbers = #tpu.dot_dimension_numbers<[1], [0], [0], [1], [0, 0, 1, 1], [], []>} : vector<64x128xf32>, vector<128x32xf32>, vector<64x32xf32> -> vector<64x32xf32>
    %c0_3 = arith.constant 0 : index
    %c0_4 = arith.constant 0 : index
    %8 = vector.load %arg2[%c0_3, %c0_4] : memref<32x512xf32, #tpu.memory_space<vmem>>, vector<32x512xf32>
    %cst_5 = arith.constant dense<0.000000e+00> : vector<64x512xf32>
    %9 = tpu.matmul %7, %8, %cst_5 {dimension_numbers = #tpu.dot_dimension_numbers<[1], [0], [0], [1], [0, 0, 1, 1], [], []>} : vector<64x32xf32>, vector<32x512xf32>, vector<64x512xf32> -> vector<64x512xf32>
    %c0_6 = arith.constant 0 : index
    %c0_7 = arith.constant 0 : index
    %10 = vector.load %arg4[%c0_6, %c0_7] : memref<1x512xf32, #tpu.memory_space<vmem>>, vector<1x512xf32>
    %11 = vector.broadcast %10 : vector<1x512xf32> to vector<64x512xf32>
    %12 = arith.addf %9, %11 : vector<64x512xf32>
    %cst_8 = arith.constant 0.000000e+00 : f32
    %13 = vector.broadcast %cst_8 : f32 to vector<8x128xf32>
    %cst_9 = arith.constant 0.000000e+00 : f32
    %14 = vector.broadcast %cst_9 : f32 to vector<8x128xf32>
    %15 = vector.extract_strided_slice %12 {offsets = [0, 0], sizes = [8, 512], strides = [1, 1]} : vector<64x512xf32> to vector<8x512xf32>
    %c0_10 = arith.constant 0 : index
    %c0_11 = arith.constant 0 : index
    %16 = vector.load %arg3[%c0_10, %c0_11] : memref<128x512xf32, #tpu.memory_space<vmem>>, vector<128x512xf32>
    %cst_12 = arith.constant dense<0.000000e+00> : vector<8x512xf32>
    %17 = tpu.matmul %13, %16, %cst_12 {dimension_numbers = #tpu.dot_dimension_numbers<[1], [0], [0], [1], [0, 0, 1, 1], [], []>} : vector<8x128xf32>, vector<128x512xf32>, vector<8x512xf32> -> vector<8x512xf32>
    %18 = arith.addf %15, %17 : vector<8x512xf32>
    %19 = vector.extract_strided_slice %18 {offsets = [0, 0], sizes = [8, 128], strides = [1, 1]} : vector<8x512xf32> to vector<8x128xf32>
    %20 = arith.negf %19 : vector<8x128xf32>
    %21 = math.exp %20 : vector<8x128xf32>
    %cst_13 = arith.constant 1.000000e+00 : f32
    %22 = vector.broadcast %cst_13 : f32 to vector<8x128xf32>
    %23 = arith.addf %22, %21 : vector<8x128xf32>
    %24 = arith.divf %22, %23 : vector<8x128xf32>
    %25 = vector.extract_strided_slice %18 {offsets = [0, 128], sizes = [8, 128], strides = [1, 1]} : vector<8x512xf32> to vector<8x128xf32>
    %26 = arith.negf %25 : vector<8x128xf32>
    %27 = math.exp %26 : vector<8x128xf32>
    %cst_14 = arith.constant 1.000000e+00 : f32
    %28 = vector.broadcast %cst_14 : f32 to vector<8x128xf32>
    %29 = arith.addf %28, %27 : vector<8x128xf32>
    %30 = arith.divf %28, %29 : vector<8x128xf32>
    %31 = vector.extract_strided_slice %18 {offsets = [0, 256], sizes = [8, 128], strides = [1, 1]} : vector<8x512xf32> to vector<8x128xf32>
    %32 = math.tanh %31 : vector<8x128xf32>
    %33 = vector.extract_strided_slice %18 {offsets = [0, 384], sizes = [8, 128], strides = [1, 1]} : vector<8x512xf32> to vector<8x128xf32>
    %34 = arith.negf %33 : vector<8x128xf32>
    %35 = math.exp %34 : vector<8x128xf32>
    %cst_15 = arith.constant 1.000000e+00 : f32
    %36 = vector.broadcast %cst_15 : f32 to vector<8x128xf32>
    %37 = arith.addf %36, %35 : vector<8x128xf32>
    %38 = arith.divf %36, %37 : vector<8x128xf32>
    %39 = arith.mulf %30, %14 : vector<8x128xf32>
    %40 = arith.mulf %24, %32 : vector<8x128xf32>
    %41 = arith.addf %39, %40 : vector<8x128xf32>
    %42 = math.tanh %41 : vector<8x128xf32>
    %43 = arith.mulf %38, %42 : vector<8x128xf32>
    %44 = vector.extract_strided_slice %12 {offsets = [8, 0], sizes = [8, 512], strides = [1, 1]} : vector<64x512xf32> to vector<8x512xf32>
    %c0_16 = arith.constant 0 : index
    %c0_17 = arith.constant 0 : index
    %45 = vector.load %arg3[%c0_16, %c0_17] : memref<128x512xf32, #tpu.memory_space<vmem>>, vector<128x512xf32>
    %cst_18 = arith.constant dense<0.000000e+00> : vector<8x512xf32>
    %46 = tpu.matmul %43, %45, %cst_18 {dimension_numbers = #tpu.dot_dimension_numbers<[1], [0], [0], [1], [0, 0, 1, 1], [], []>} : vector<8x128xf32>, vector<128x512xf32>, vector<8x512xf32> -> vector<8x512xf32>
    %47 = arith.addf %44, %46 : vector<8x512xf32>
    %48 = vector.extract_strided_slice %47 {offsets = [0, 0], sizes = [8, 128], strides = [1, 1]} : vector<8x512xf32> to vector<8x128xf32>
    %49 = arith.negf %48 : vector<8x128xf32>
    %50 = math.exp %49 : vector<8x128xf32>
    %cst_19 = arith.constant 1.000000e+00 : f32
    %51 = vector.broadcast %cst_19 : f32 to vector<8x128xf32>
    %52 = arith.addf %51, %50 : vector<8x128xf32>
    %53 = arith.divf %51, %52 : vector<8x128xf32>
    %54 = vector.extract_strided_slice %47 {offsets = [0, 128], sizes = [8, 128], strides = [1, 1]} : vector<8x512xf32> to vector<8x128xf32>
    %55 = arith.negf %54 : vector<8x128xf32>
    %56 = math.exp %55 : vector<8x128xf32>
    %cst_20 = arith.constant 1.000000e+00 : f32
    %57 = vector.broadcast %cst_20 : f32 to vector<8x128xf32>
    %58 = arith.addf %57, %56 : vector<8x128xf32>
    %59 = arith.divf %57, %58 : vector<8x128xf32>
    %60 = vector.extract_strided_slice %47 {offsets = [0, 256], sizes = [8, 128], strides = [1, 1]} : vector<8x512xf32> to vector<8x128xf32>
    %61 = math.tanh %60 : vector<8x128xf32>
    %62 = vector.extract_strided_slice %47 {offsets = [0, 384], sizes = [8, 128], strides = [1, 1]} : vector<8x512xf32> to vector<8x128xf32>
    %63 = arith.negf %62 : vector<8x128xf32>
    %64 = math.exp %63 : vector<8x128xf32>
    %cst_21 = arith.constant 1.000000e+00 : f32
    %65 = vector.broadcast %cst_21 : f32 to vector<8x128xf32>
    %66 = arith.addf %65, %64 : vector<8x128xf32>
    %67 = arith.divf %65, %66 : vector<8x128xf32>
    %68 = arith.mulf %59, %41 : vector<8x128xf32>
    %69 = arith.mulf %53, %61 : vector<8x128xf32>
    %70 = arith.addf %68, %69 : vector<8x128xf32>
    %71 = math.tanh %70 : vector<8x128xf32>
    %72 = arith.mulf %67, %71 : vector<8x128xf32>
    %73 = vector.extract_strided_slice %12 {offsets = [16, 0], sizes = [8, 512], strides = [1, 1]} : vector<64x512xf32> to vector<8x512xf32>
    %c0_22 = arith.constant 0 : index
    %c0_23 = arith.constant 0 : index
    %74 = vector.load %arg3[%c0_22, %c0_23] : memref<128x512xf32, #tpu.memory_space<vmem>>, vector<128x512xf32>
    %cst_24 = arith.constant dense<0.000000e+00> : vector<8x512xf32>
    %75 = tpu.matmul %72, %74, %cst_24 {dimension_numbers = #tpu.dot_dimension_numbers<[1], [0], [0], [1], [0, 0, 1, 1], [], []>} : vector<8x128xf32>, vector<128x512xf32>, vector<8x512xf32> -> vector<8x512xf32>
    %76 = arith.addf %73, %75 : vector<8x512xf32>
    %77 = vector.extract_strided_slice %76 {offsets = [0, 0], sizes = [8, 128], strides = [1, 1]} : vector<8x512xf32> to vector<8x128xf32>
    %78 = arith.negf %77 : vector<8x128xf32>
    %79 = math.exp %78 : vector<8x128xf32>
    %cst_25 = arith.constant 1.000000e+00 : f32
    %80 = vector.broadcast %cst_25 : f32 to vector<8x128xf32>
    %81 = arith.addf %80, %79 : vector<8x128xf32>
    %82 = arith.divf %80, %81 : vector<8x128xf32>
    %83 = vector.extract_strided_slice %76 {offsets = [0, 128], sizes = [8, 128], strides = [1, 1]} : vector<8x512xf32> to vector<8x128xf32>
    %84 = arith.negf %83 : vector<8x128xf32>
    %85 = math.exp %84 : vector<8x128xf32>
    %cst_26 = arith.constant 1.000000e+00 : f32
    %86 = vector.broadcast %cst_26 : f32 to vector<8x128xf32>
    %87 = arith.addf %86, %85 : vector<8x128xf32>
    %88 = arith.divf %86, %87 : vector<8x128xf32>
    %89 = vector.extract_strided_slice %76 {offsets = [0, 256], sizes = [8, 128], strides = [1, 1]} : vector<8x512xf32> to vector<8x128xf32>
    %90 = math.tanh %89 : vector<8x128xf32>
    %91 = vector.extract_strided_slice %76 {offsets = [0, 384], sizes = [8, 128], strides = [1, 1]} : vector<8x512xf32> to vector<8x128xf32>
    %92 = arith.negf %91 : vector<8x128xf32>
    %93 = math.exp %92 : vector<8x128xf32>
    %cst_27 = arith.constant 1.000000e+00 : f32
    %94 = vector.broadcast %cst_27 : f32 to vector<8x128xf32>
    %95 = arith.addf %94, %93 : vector<8x128xf32>
    %96 = arith.divf %94, %95 : vector<8x128xf32>
    %97 = arith.mulf %88, %70 : vector<8x128xf32>
    %98 = arith.mulf %82, %90 : vector<8x128xf32>
    %99 = arith.addf %97, %98 : vector<8x128xf32>
    %100 = math.tanh %99 : vector<8x128xf32>
    %101 = arith.mulf %96, %100 : vector<8x128xf32>
    %102 = vector.extract_strided_slice %12 {offsets = [24, 0], sizes = [8, 512], strides = [1, 1]} : vector<64x512xf32> to vector<8x512xf32>
    %c0_28 = arith.constant 0 : index
    %c0_29 = arith.constant 0 : index
    %103 = vector.load %arg3[%c0_28, %c0_29] : memref<128x512xf32, #tpu.memory_space<vmem>>, vector<128x512xf32>
    %cst_30 = arith.constant dense<0.000000e+00> : vector<8x512xf32>
    %104 = tpu.matmul %101, %103, %cst_30 {dimension_numbers = #tpu.dot_dimension_numbers<[1], [0], [0], [1], [0, 0, 1, 1], [], []>} : vector<8x128xf32>, vector<128x512xf32>, vector<8x512xf32> -> vector<8x512xf32>
    %105 = arith.addf %102, %104 : vector<8x512xf32>
    %106 = vector.extract_strided_slice %105 {offsets = [0, 0], sizes = [8, 128], strides = [1, 1]} : vector<8x512xf32> to vector<8x128xf32>
    %107 = arith.negf %106 : vector<8x128xf32>
    %108 = math.exp %107 : vector<8x128xf32>
    %cst_31 = arith.constant 1.000000e+00 : f32
    %109 = vector.broadcast %cst_31 : f32 to vector<8x128xf32>
    %110 = arith.addf %109, %108 : vector<8x128xf32>
    %111 = arith.divf %109, %110 : vector<8x128xf32>
    %112 = vector.extract_strided_slice %105 {offsets = [0, 128], sizes = [8, 128], strides = [1, 1]} : vector<8x512xf32> to vector<8x128xf32>
    %113 = arith.negf %112 : vector<8x128xf32>
    %114 = math.exp %113 : vector<8x128xf32>
    %cst_32 = arith.constant 1.000000e+00 : f32
    %115 = vector.broadcast %cst_32 : f32 to vector<8x128xf32>
    %116 = arith.addf %115, %114 : vector<8x128xf32>
    %117 = arith.divf %115, %116 : vector<8x128xf32>
    %118 = vector.extract_strided_slice %105 {offsets = [0, 256], sizes = [8, 128], strides = [1, 1]} : vector<8x512xf32> to vector<8x128xf32>
    %119 = math.tanh %118 : vector<8x128xf32>
    %120 = vector.extract_strided_slice %105 {offsets = [0, 384], sizes = [8, 128], strides = [1, 1]} : vector<8x512xf32> to vector<8x128xf32>
    %121 = arith.negf %120 : vector<8x128xf32>
    %122 = math.exp %121 : vector<8x128xf32>
    %cst_33 = arith.constant 1.000000e+00 : f32
    %123 = vector.broadcast %cst_33 : f32 to vector<8x128xf32>
    %124 = arith.addf %123, %122 : vector<8x128xf32>
    %125 = arith.divf %123, %124 : vector<8x128xf32>
    %126 = arith.mulf %117, %99 : vector<8x128xf32>
    %127 = arith.mulf %111, %119 : vector<8x128xf32>
    %128 = arith.addf %126, %127 : vector<8x128xf32>
    %129 = math.tanh %128 : vector<8x128xf32>
    %130 = arith.mulf %125, %129 : vector<8x128xf32>
    %131 = vector.extract_strided_slice %12 {offsets = [32, 0], sizes = [8, 512], strides = [1, 1]} : vector<64x512xf32> to vector<8x512xf32>
    %c0_34 = arith.constant 0 : index
    %c0_35 = arith.constant 0 : index
    %132 = vector.load %arg3[%c0_34, %c0_35] : memref<128x512xf32, #tpu.memory_space<vmem>>, vector<128x512xf32>
    %cst_36 = arith.constant dense<0.000000e+00> : vector<8x512xf32>
    %133 = tpu.matmul %130, %132, %cst_36 {dimension_numbers = #tpu.dot_dimension_numbers<[1], [0], [0], [1], [0, 0, 1, 1], [], []>} : vector<8x128xf32>, vector<128x512xf32>, vector<8x512xf32> -> vector<8x512xf32>
    %134 = arith.addf %131, %133 : vector<8x512xf32>
    %135 = vector.extract_strided_slice %134 {offsets = [0, 0], sizes = [8, 128], strides = [1, 1]} : vector<8x512xf32> to vector<8x128xf32>
    %136 = arith.negf %135 : vector<8x128xf32>
    %137 = math.exp %136 : vector<8x128xf32>
    %cst_37 = arith.constant 1.000000e+00 : f32
    %138 = vector.broadcast %cst_37 : f32 to vector<8x128xf32>
    %139 = arith.addf %138, %137 : vector<8x128xf32>
    %140 = arith.divf %138, %139 : vector<8x128xf32>
    %141 = vector.extract_strided_slice %134 {offsets = [0, 128], sizes = [8, 128], strides = [1, 1]} : vector<8x512xf32> to vector<8x128xf32>
    %142 = arith.negf %141 : vector<8x128xf32>
    %143 = math.exp %142 : vector<8x128xf32>
    %cst_38 = arith.constant 1.000000e+00 : f32
    %144 = vector.broadcast %cst_38 : f32 to vector<8x128xf32>
    %145 = arith.addf %144, %143 : vector<8x128xf32>
    %146 = arith.divf %144, %145 : vector<8x128xf32>
    %147 = vector.extract_strided_slice %134 {offsets = [0, 256], sizes = [8, 128], strides = [1, 1]} : vector<8x512xf32> to vector<8x128xf32>
    %148 = math.tanh %147 : vector<8x128xf32>
    %149 = vector.extract_strided_slice %134 {offsets = [0, 384], sizes = [8, 128], strides = [1, 1]} : vector<8x512xf32> to vector<8x128xf32>
    %150 = arith.negf %149 : vector<8x128xf32>
    %151 = math.exp %150 : vector<8x128xf32>
    %cst_39 = arith.constant 1.000000e+00 : f32
    %152 = vector.broadcast %cst_39 : f32 to vector<8x128xf32>
    %153 = arith.addf %152, %151 : vector<8x128xf32>
    %154 = arith.divf %152, %153 : vector<8x128xf32>
    %155 = arith.mulf %146, %128 : vector<8x128xf32>
    %156 = arith.mulf %140, %148 : vector<8x128xf32>
    %157 = arith.addf %155, %156 : vector<8x128xf32>
    %158 = math.tanh %157 : vector<8x128xf32>
    %159 = arith.mulf %154, %158 : vector<8x128xf32>
    %160 = vector.extract_strided_slice %12 {offsets = [40, 0], sizes = [8, 512], strides = [1, 1]} : vector<64x512xf32> to vector<8x512xf32>
    %c0_40 = arith.constant 0 : index
    %c0_41 = arith.constant 0 : index
    %161 = vector.load %arg3[%c0_40, %c0_41] : memref<128x512xf32, #tpu.memory_space<vmem>>, vector<128x512xf32>
    %cst_42 = arith.constant dense<0.000000e+00> : vector<8x512xf32>
    %162 = tpu.matmul %159, %161, %cst_42 {dimension_numbers = #tpu.dot_dimension_numbers<[1], [0], [0], [1], [0, 0, 1, 1], [], []>} : vector<8x128xf32>, vector<128x512xf32>, vector<8x512xf32> -> vector<8x512xf32>
    %163 = arith.addf %160, %162 : vector<8x512xf32>
    %164 = vector.extract_strided_slice %163 {offsets = [0, 0], sizes = [8, 128], strides = [1, 1]} : vector<8x512xf32> to vector<8x128xf32>
    %165 = arith.negf %164 : vector<8x128xf32>
    %166 = math.exp %165 : vector<8x128xf32>
    %cst_43 = arith.constant 1.000000e+00 : f32
    %167 = vector.broadcast %cst_43 : f32 to vector<8x128xf32>
    %168 = arith.addf %167, %166 : vector<8x128xf32>
    %169 = arith.divf %167, %168 : vector<8x128xf32>
    %170 = vector.extract_strided_slice %163 {offsets = [0, 128], sizes = [8, 128], strides = [1, 1]} : vector<8x512xf32> to vector<8x128xf32>
    %171 = arith.negf %170 : vector<8x128xf32>
    %172 = math.exp %171 : vector<8x128xf32>
    %cst_44 = arith.constant 1.000000e+00 : f32
    %173 = vector.broadcast %cst_44 : f32 to vector<8x128xf32>
    %174 = arith.addf %173, %172 : vector<8x128xf32>
    %175 = arith.divf %173, %174 : vector<8x128xf32>
    %176 = vector.extract_strided_slice %163 {offsets = [0, 256], sizes = [8, 128], strides = [1, 1]} : vector<8x512xf32> to vector<8x128xf32>
    %177 = math.tanh %176 : vector<8x128xf32>
    %178 = vector.extract_strided_slice %163 {offsets = [0, 384], sizes = [8, 128], strides = [1, 1]} : vector<8x512xf32> to vector<8x128xf32>
    %179 = arith.negf %178 : vector<8x128xf32>
    %180 = math.exp %179 : vector<8x128xf32>
    %cst_45 = arith.constant 1.000000e+00 : f32
    %181 = vector.broadcast %cst_45 : f32 to vector<8x128xf32>
    %182 = arith.addf %181, %180 : vector<8x128xf32>
    %183 = arith.divf %181, %182 : vector<8x128xf32>
    %184 = arith.mulf %175, %157 : vector<8x128xf32>
    %185 = arith.mulf %169, %177 : vector<8x128xf32>
    %186 = arith.addf %184, %185 : vector<8x128xf32>
    %187 = math.tanh %186 : vector<8x128xf32>
    %188 = arith.mulf %183, %187 : vector<8x128xf32>
    %189 = vector.extract_strided_slice %12 {offsets = [48, 0], sizes = [8, 512], strides = [1, 1]} : vector<64x512xf32> to vector<8x512xf32>
    %c0_46 = arith.constant 0 : index
    %c0_47 = arith.constant 0 : index
    %190 = vector.load %arg3[%c0_46, %c0_47] : memref<128x512xf32, #tpu.memory_space<vmem>>, vector<128x512xf32>
    %cst_48 = arith.constant dense<0.000000e+00> : vector<8x512xf32>
    %191 = tpu.matmul %188, %190, %cst_48 {dimension_numbers = #tpu.dot_dimension_numbers<[1], [0], [0], [1], [0, 0, 1, 1], [], []>} : vector<8x128xf32>, vector<128x512xf32>, vector<8x512xf32> -> vector<8x512xf32>
    %192 = arith.addf %189, %191 : vector<8x512xf32>
    %193 = vector.extract_strided_slice %192 {offsets = [0, 0], sizes = [8, 128], strides = [1, 1]} : vector<8x512xf32> to vector<8x128xf32>
    %194 = arith.negf %193 : vector<8x128xf32>
    %195 = math.exp %194 : vector<8x128xf32>
    %cst_49 = arith.constant 1.000000e+00 : f32
    %196 = vector.broadcast %cst_49 : f32 to vector<8x128xf32>
    %197 = arith.addf %196, %195 : vector<8x128xf32>
    %198 = arith.divf %196, %197 : vector<8x128xf32>
    %199 = vector.extract_strided_slice %192 {offsets = [0, 128], sizes = [8, 128], strides = [1, 1]} : vector<8x512xf32> to vector<8x128xf32>
    %200 = arith.negf %199 : vector<8x128xf32>
    %201 = math.exp %200 : vector<8x128xf32>
    %cst_50 = arith.constant 1.000000e+00 : f32
    %202 = vector.broadcast %cst_50 : f32 to vector<8x128xf32>
    %203 = arith.addf %202, %201 : vector<8x128xf32>
    %204 = arith.divf %202, %203 : vector<8x128xf32>
    %205 = vector.extract_strided_slice %192 {offsets = [0, 256], sizes = [8, 128], strides = [1, 1]} : vector<8x512xf32> to vector<8x128xf32>
    %206 = math.tanh %205 : vector<8x128xf32>
    %207 = vector.extract_strided_slice %192 {offsets = [0, 384], sizes = [8, 128], strides = [1, 1]} : vector<8x512xf32> to vector<8x128xf32>
    %208 = arith.negf %207 : vector<8x128xf32>
    %209 = math.exp %208 : vector<8x128xf32>
    %cst_51 = arith.constant 1.000000e+00 : f32
    %210 = vector.broadcast %cst_51 : f32 to vector<8x128xf32>
    %211 = arith.addf %210, %209 : vector<8x128xf32>
    %212 = arith.divf %210, %211 : vector<8x128xf32>
    %213 = arith.mulf %204, %186 : vector<8x128xf32>
    %214 = arith.mulf %198, %206 : vector<8x128xf32>
    %215 = arith.addf %213, %214 : vector<8x128xf32>
    %216 = math.tanh %215 : vector<8x128xf32>
    %217 = arith.mulf %212, %216 : vector<8x128xf32>
    %218 = vector.extract_strided_slice %12 {offsets = [56, 0], sizes = [8, 512], strides = [1, 1]} : vector<64x512xf32> to vector<8x512xf32>
    %c0_52 = arith.constant 0 : index
    %c0_53 = arith.constant 0 : index
    %219 = vector.load %arg3[%c0_52, %c0_53] : memref<128x512xf32, #tpu.memory_space<vmem>>, vector<128x512xf32>
    %cst_54 = arith.constant dense<0.000000e+00> : vector<8x512xf32>
    %220 = tpu.matmul %217, %219, %cst_54 {dimension_numbers = #tpu.dot_dimension_numbers<[1], [0], [0], [1], [0, 0, 1, 1], [], []>} : vector<8x128xf32>, vector<128x512xf32>, vector<8x512xf32> -> vector<8x512xf32>
    %221 = arith.addf %218, %220 : vector<8x512xf32>
    %222 = vector.extract_strided_slice %221 {offsets = [0, 0], sizes = [8, 128], strides = [1, 1]} : vector<8x512xf32> to vector<8x128xf32>
    %223 = arith.negf %222 : vector<8x128xf32>
    %224 = math.exp %223 : vector<8x128xf32>
    %cst_55 = arith.constant 1.000000e+00 : f32
    %225 = vector.broadcast %cst_55 : f32 to vector<8x128xf32>
    %226 = arith.addf %225, %224 : vector<8x128xf32>
    %227 = arith.divf %225, %226 : vector<8x128xf32>
    %228 = vector.extract_strided_slice %221 {offsets = [0, 128], sizes = [8, 128], strides = [1, 1]} : vector<8x512xf32> to vector<8x128xf32>
    %229 = arith.negf %228 : vector<8x128xf32>
    %230 = math.exp %229 : vector<8x128xf32>
    %cst_56 = arith.constant 1.000000e+00 : f32
    %231 = vector.broadcast %cst_56 : f32 to vector<8x128xf32>
    %232 = arith.addf %231, %230 : vector<8x128xf32>
    %233 = arith.divf %231, %232 : vector<8x128xf32>
    %234 = vector.extract_strided_slice %221 {offsets = [0, 256], sizes = [8, 128], strides = [1, 1]} : vector<8x512xf32> to vector<8x128xf32>
    %235 = math.tanh %234 : vector<8x128xf32>
    %236 = vector.extract_strided_slice %221 {offsets = [0, 384], sizes = [8, 128], strides = [1, 1]} : vector<8x512xf32> to vector<8x128xf32>
    %237 = arith.negf %236 : vector<8x128xf32>
    %238 = math.exp %237 : vector<8x128xf32>
    %cst_57 = arith.constant 1.000000e+00 : f32
    %239 = vector.broadcast %cst_57 : f32 to vector<8x128xf32>
    %240 = arith.addf %239, %238 : vector<8x128xf32>
    %241 = arith.divf %239, %240 : vector<8x128xf32>
    %242 = arith.mulf %233, %215 : vector<8x128xf32>
    %243 = arith.mulf %227, %235 : vector<8x128xf32>
    %244 = arith.addf %242, %243 : vector<8x128xf32>
    %245 = math.tanh %244 : vector<8x128xf32>
    %246 = arith.mulf %241, %245 : vector<8x128xf32>
    %c0_58 = arith.constant 0 : index
    %c0_59 = arith.constant 0 : index
    %247 = vector.load %arg5[%c0_58, %c0_59] : memref<128x128xf32, #tpu.memory_space<vmem>>, vector<128x128xf32>
    %cst_60 = arith.constant dense<0.000000e+00> : vector<8x128xf32>
    %248 = tpu.matmul %246, %247, %cst_60 {dimension_numbers = #tpu.dot_dimension_numbers<[1], [0], [0], [1], [0, 0, 1, 1], [], []>} : vector<8x128xf32>, vector<128x128xf32>, vector<8x128xf32> -> vector<8x128xf32>
    %c0_61 = arith.constant 0 : index
    %c0_62 = arith.constant 0 : index
    %249 = vector.load %arg6[%c0_61, %c0_62] : memref<1x128xf32, #tpu.memory_space<vmem>>, vector<1x128xf32>
    %250 = vector.broadcast %249 : vector<1x128xf32> to vector<8x128xf32>
    %251 = arith.addf %248, %250 : vector<8x128xf32>
    %cst_63 = arith.constant dense<0xFF800000> : vector<8xf32>
    %252 = vector.multi_reduction <maximumf>, %251, %cst_63 [1] : vector<8x128xf32> to vector<8xf32>
    %253 = vector.shape_cast %252 : vector<8xf32> to vector<8x1xf32>
    %254 = vector.broadcast %253 : vector<8x1xf32> to vector<8x128xf32>
    %255 = arith.subf %251, %254 : vector<8x128xf32>
    %256 = math.exp %255 : vector<8x128xf32>
    %cst_64 = arith.constant dense<0.000000e+00> : vector<8xf32>
    %257 = vector.multi_reduction <add>, %256, %cst_64 [1] : vector<8x128xf32> to vector<8xf32>
    %258 = vector.shape_cast %257 : vector<8xf32> to vector<8x1xf32>
    %259 = tpu.reciprocal %258 {approx = true} : vector<8x1xf32> -> vector<8x1xf32>
    %260 = arith.mulf %258, %259 : vector<8x1xf32>
    %cst_65 = arith.constant 2.000000e+00 : f32
    %261 = vector.broadcast %cst_65 : f32 to vector<8x1xf32>
    %262 = arith.subf %261, %260 : vector<8x1xf32>
    %263 = arith.mulf %259, %262 : vector<8x1xf32>
    %264 = vector.broadcast %263 : vector<8x1xf32> to vector<8x128xf32>
    %265 = arith.mulf %256, %264 : vector<8x128xf32>
    %c0_66 = arith.constant 0 : index
    %c0_67 = arith.constant 0 : index
    %266 = vector.load %arg7[%c0_66, %c0_67] : memref<8x128xf32, #tpu.memory_space<vmem>>, vector<8x128xf32>
    tpu.vector_store %arg7[%c0_66, %c0_67], %265 {strides = array<i32>} : memref<8x128xf32, #tpu.memory_space<vmem>>, vector<8x128xf32>,
    %c0_68 = arith.constant 0 : index
    %c0_69 = arith.constant 0 : index
    %267 = vector.load %arg8[%c0_68, %c0_69] : memref<8x128xf32, #tpu.memory_space<vmem>>, vector<8x128xf32>
    tpu.vector_store %arg8[%c0_68, %c0_69], %251 {strides = array<i32>} : memref<8x128xf32, #tpu.memory_space<vmem>>, vector<8x128xf32>,
    %c0_70 = arith.constant 0 : index
    %c0_71 = arith.constant 0 : index
    %268 = vector.load %arg9[%c0_70, %c0_71] : memref<8x128xf32, #tpu.memory_space<vmem>>, vector<8x128xf32>
    tpu.vector_store %arg9[%c0_70, %c0_71], %246 {strides = array<i32>} : memref<8x128xf32, #tpu.memory_space<vmem>>, vector<8x128xf32>,
    %c0_72 = arith.constant 0 : index
    %c0_73 = arith.constant 0 : index
    %269 = vector.load %arg10[%c0_72, %c0_73] : memref<8x128xf32, #tpu.memory_space<vmem>>, vector<8x128xf32>
    tpu.vector_store %arg10[%c0_72, %c0_73], %244 {strides = array<i32>} : memref<8x128xf32, #tpu.memory_space<vmem>>, vector<8x128xf32>,
    return
  }
}

</mosaic_0001>

<llo_original>
// kernel: tpu_custom_call.1
$region0: #{tpu_custom_call.1}
  #allocation0 [shape = 'u32[]', space=smem, size = 0x4, offset = 0x4, fixed_abs, tag = 'smem constant byte address 0x4 - core index']
  #allocation1 [shape = 'u32[144,128]{1,0:T(1,128)}', space=vmem, size = 0x12000, scoped, tag = 'internal scratch']
  %s0 = inlined_call_operand.vmem [shape: s32[64,1], index: 0, kind: input, shape index: {}]
  %s1 = inlined_call_operand.vmem [shape: f32[128,32], index: 1, kind: input, shape index: {}]
  %s2 = inlined_call_operand.vmem [shape: f32[32,512], index: 2, kind: input, shape index: {}]
  %s3 = inlined_call_operand.hbm [shape: f32[128,512], index: 3, kind: input, shape index: {}]
  %s4 = inlined_call_operand.vmem [shape: f32[1,512], index: 4, kind: input, shape index: {}]
  %s5 = inlined_call_operand.hbm [shape: f32[128,128], index: 5, kind: input, shape index: {}]
  %s6 = inlined_call_operand.vmem [shape: f32[1,128], index: 6, kind: input, shape index: {}]
  %s7 = inlined_call_operand.hbm [shape: f32[8,128], index: 7, kind: output, shape index: {0}]
  %s8 = inlined_call_operand.hbm [shape: f32[8,128], index: 8, kind: output, shape index: {1}]
  %s9 = inlined_call_operand.hbm [shape: f32[8,128], index: 9, kind: output, shape index: {2}]
  %s10 = inlined_call_operand.hbm [shape: f32[8,128], index: 10, kind: output, shape index: {3}]
  %11 = xla_tuple %s7, %s8, %s9, %s10
  %s12 = sld [smem:[#allocation0]]
  $region70: #{tpu_custom_call.1} parent=0
    _
  %s14 = ssub.s32 1, %s12
  %s15 = scalar_select 0, %s14, %s12
  $region1: #{tpu_custom_call.1} parent=0
    #allocation2 [shape = 'u8[262144]{0}', space=vmem, size = 0x40000, scoped, tag = 'input window, operand 3, single buffered']
    #allocation3 [shape = 's32[1]{0}', space=sflag, size = 0x4, scoped, tag = 'scoped memory for tpu_custom_call.1']
    #allocation4 [shape = 's32[1]{0}', space=sflag, size = 0x4, scoped, tag = 'scoped memory for tpu_custom_call.1']
    #allocation5 [shape = 'u8[65536]{0}', space=vmem, size = 0x10000, scoped, tag = 'input window, operand 5, single buffered']
    #allocation6 [shape = 's32[1]{0}', space=sflag, size = 0x4, scoped, tag = 'scoped memory for tpu_custom_call.1']
    #allocation7 [shape = 'u8[4096]{0}', space=vmem, size = 0x1000, scoped, tag = 'output window, operand 0, single buffered']
    #allocation8 [shape = 'u8[4096]{0}', space=vmem, size = 0x1000, scoped, tag = 'output window, operand 1, single buffered']
    #allocation9 [shape = 's32[1]{0}', space=sflag, size = 0x4, scoped, tag = 'scoped memory for tpu_custom_call.1']
    #allocation10 [shape = 'u8[4096]{0}', space=vmem, size = 0x1000, scoped, tag = 'output window, operand 2, single buffered']
    #allocation11 [shape = 'u8[4096]{0}', space=vmem, size = 0x1000, scoped, tag = 'output window, operand 3, single buffered']
    #allocation12 [shape = 's32[1]{0}', space=sflag, size = 0x4, scoped, tag = 'scoped memory for tpu_custom_call.1']
    %16 = vsyncpa [#allocation3], 0
    %17 = vsyncpa [#allocation6], 0
    %18 = vsyncpa [#allocation4], 0
    %19 = vsyncpa [#allocation9], 0
    %20 = vsyncpa [#allocation12], 0
    // Predicated region
    $region2: #{tpu_custom_call.1} parent=1 // pred_check
      _
    $region3: #{tpu_custom_call.1} parent=1 // pred_check_branch
      %22 = sbr.rel (0) target = $region5
    $region4: #{tpu_custom_call.1} parent=1 // pred_region
      _
    $region5: #{tpu_custom_call.1} parent=1 // pred_fallthru
      _
    // Predicated region
    $region6: #{tpu_custom_call.1} parent=1 // pred_check
      _
    $region7: #{tpu_custom_call.1} parent=1 // pred_check_branch
      %24 = sbr.rel (0) target = $region9
    $region8: #{tpu_custom_call.1} parent=1 // pred_region
      _
    $region9: #{tpu_custom_call.1} parent=1 // pred_fallthru
      _
    // Predicated region
    $region10: #{tpu_custom_call.1} parent=1 // pred_check
      _
    $region11: #{tpu_custom_call.1} parent=1 // pred_check_branch
      %26 = sbr.rel (0) target = $region13
    $region12: #{tpu_custom_call.1} parent=1 // pred_region
      _
    $region13: #{tpu_custom_call.1} parent=1 // pred_fallthru
      _
    // Predicated region
    $region14: #{tpu_custom_call.1} parent=1 // pred_check
      _
    $region15: #{tpu_custom_call.1} parent=1 // pred_check_branch
      %28 = sbr.rel (0) target = $region17
    $region16: #{tpu_custom_call.1} parent=1 // pred_region
      %s30 = ssub.s32 8192, 8192
      %31 = vsyncadd [#allocation3], %s30
      %s32 = sshll.u32 [#allocation2], 4
      %s33 = int_to_ptr.vmem [resolvable:$true] %s32
      %38 = dma.hbm_to_vmem [thread:$0]  %s3, 8192, %s33, [#allocation3], 512, 512, 32
    $region17: #{tpu_custom_call.1} parent=1 // pred_fallthru
      _
    // Predicated region
    $region18: #{tpu_custom_call.1} parent=1 // pred_check
      _
    $region19: #{tpu_custom_call.1} parent=1 // pred_check_branch
      %40 = sbr.rel (0) target = $region21
    $region20: #{tpu_custom_call.1} parent=1 // pred_region
      _
    $region21: #{tpu_custom_call.1} parent=1 // pred_fallthru
      _
    // Predicated region
    $region22: #{tpu_custom_call.1} parent=1 // pred_check
      _
    $region23: #{tpu_custom_call.1} parent=1 // pred_check_branch
      %42 = sbr.rel (0) target = $region25
    $region24: #{tpu_custom_call.1} parent=1 // pred_region
      %s44 = ssub.s32 2048, 2048
      %45 = vsyncadd [#allocation6], %s44
      %s46 = sshll.u32 [#allocation5], 4
      %s47 = int_to_ptr.vmem [resolvable:$true] %s46
      %52 = dma.hbm_to_vmem [thread:$0]  %s5, 2048, %s47, [#allocation6], 128, 128, 8
    $region25: #{tpu_custom_call.1} parent=1 // pred_fallthru
      _
    // Predicated region
    $region26: #{tpu_custom_call.1} parent=1 // pred_check
      _
    $region27: #{tpu_custom_call.1} parent=1 // pred_check_branch
      %54 = sbr.rel (0) target = $region29
    $region28: #{tpu_custom_call.1} parent=1 // pred_region
      _
    $region29: #{tpu_custom_call.1} parent=1 // pred_fallthru
      _
    // Predicated region
    $region30: #{tpu_custom_call.1} parent=1 // pred_check
      _
    $region31: #{tpu_custom_call.1} parent=1 // pred_check_branch
      %56 = sbr.rel (0) target = $region33
    $region32: #{tpu_custom_call.1} parent=1 // pred_region
      %57 = dma.done [#allocation3], 8192
    $region33: #{tpu_custom_call.1} parent=1 // pred_fallthru
      _
    // Predicated region
    $region34: #{tpu_custom_call.1} parent=1 // pred_check
      _
    $region35: #{tpu_custom_call.1} parent=1 // pred_check_branch
      %59 = sbr.rel (0) target = $region37
    $region36: #{tpu_custom_call.1} parent=1 // pred_region
      %60 = dma.done [#allocation6], 2048
    $region37: #{tpu_custom_call.1} parent=1 // pred_fallthru
      _
    %v61 = vld [vmem:[%s0] sm:$0xff]
    %v62 = vld [vmem:[%s0 + $0x8] sm:$0xff]
    %v63 = vld [vmem:[%s0 + $0x10] sm:$0xff]
    %v64 = vld [vmem:[%s0 + $0x18] sm:$0xff]
    %v65 = vld [vmem:[%s0 + $0x20] sm:$0xff]
    %v66 = vld [vmem:[%s0 + $0x28] sm:$0xff]
    %v67 = vld [vmem:[%s0 + $0x30] sm:$0xff]
    %v68 = vld [vmem:[%s0 + $0x38] sm:$0xff]
    %v69 = vlaneseq
    %v70 = vand.u32 %v69, 127
    %71 = vset.pattern.permute.xlu0 0
    %72 = vperm.xlu0 %71, %v61
    %v73 = vpop.permute.xlu0 %72
    %74 = vset.pattern.permute.xlu0 0
    %75 = vperm.xlu0 %74, %v62
    %v76 = vpop.permute.xlu0 %75
    %77 = vset.pattern.permute.xlu0 0
    %78 = vperm.xlu0 %77, %v63
    %v79 = vpop.permute.xlu0 %78
    %80 = vset.pattern.permute.xlu0 0
    %81 = vperm.xlu0 %80, %v64
    %v82 = vpop.permute.xlu0 %81
    %83 = vset.pattern.permute.xlu0 0
    %84 = vperm.xlu0 %83, %v65
    %v85 = vpop.permute.xlu0 %84
    %86 = vset.pattern.permute.xlu0 0
    %87 = vperm.xlu0 %86, %v66
    %v88 = vpop.permute.xlu0 %87
    %89 = vset.pattern.permute.xlu0 0
    %90 = vperm.xlu0 %89, %v67
    %v91 = vpop.permute.xlu0 %90
    %92 = vset.pattern.permute.xlu0 0
    %93 = vperm.xlu0 %92, %v68
    %v94 = vpop.permute.xlu0 %93
    %vm95 = vcmp.eq.s32.totalorder %v70, %v73
    %vm96 = vcmp.eq.s32.totalorder %v70, %v76
    %vm97 = vcmp.eq.s32.totalorder %v70, %v79
    %vm98 = vcmp.eq.s32.totalorder %v70, %v82
    %vm99 = vcmp.eq.s32.totalorder %v70, %v85
    %vm100 = vcmp.eq.s32.totalorder %v70, %v88
    %vm101 = vcmp.eq.s32.totalorder %v70, %v91
    %vm102 = vcmp.eq.s32.totalorder %v70, %v94
    %v103 = vsel %vm95, 1, 0
    %v104 = vsel %vm96, 1, 0
    %v105 = vsel %vm97, 1, 0
    %v106 = vsel %vm98, 1, 0
    %v107 = vsel %vm99, 1, 0
    %v108 = vsel %vm100, 1, 0
    %v109 = vsel %vm101, 1, 0
    %v110 = vsel %vm102, 1, 0
    %v111 = vcvt.s32.f32 %v103
    %v112 = vcvt.s32.f32 %v104
    %v113 = vcvt.s32.f32 %v105
    %v114 = vcvt.s32.f32 %v106
    %v115 = vcvt.s32.f32 %v107
    %v116 = vcvt.s32.f32 %v108
    %v117 = vcvt.s32.f32 %v109
    %v118 = vcvt.s32.f32 %v110
    %v119 = vld [vmem:[%s1] sm:$0xff]
    %v120 = vld [vmem:[%s1 + $0x8] sm:$0xff]
    %v121 = vld [vmem:[%s1 + $0x10] sm:$0xff]
    %v122 = vld [vmem:[%s1 + $0x18] sm:$0xff]
    %v123 = vld [vmem:[%s1 + $0x20] sm:$0xff]
    %v124 = vld [vmem:[%s1 + $0x28] sm:$0xff]
    %v125 = vld [vmem:[%s1 + $0x30] sm:$0xff]
    %v126 = vld [vmem:[%s1 + $0x38] sm:$0xff]
    %v127 = vld [vmem:[%s1 + $0x40] sm:$0xff]
    %v128 = vld [vmem:[%s1 + $0x48] sm:$0xff]
    %v129 = vld [vmem:[%s1 + $0x50] sm:$0xff]
    %v130 = vld [vmem:[%s1 + $0x58] sm:$0xff]
    %v131 = vld [vmem:[%s1 + $0x60] sm:$0xff]
    %v132 = vld [vmem:[%s1 + $0x68] sm:$0xff]
    %v133 = vld [vmem:[%s1 + $0x70] sm:$0xff]
    %v134 = vld [vmem:[%s1 + $0x78] sm:$0xff]
    %135 = vmatprep.subr.mxu0 0.0
    %136 = vmatpush1.msra.mxu0 %v119
    %137 = vmatprep.subr.mxu0 0.0
    %138 = vmatpush1.msra.mxu0 %v120
    %139 = vmatprep.subr.mxu0 0.0
    %140 = vmatpush1.msra.mxu0 %v121
    %141 = vmatprep.subr.mxu0 0.0
    %142 = vmatpush1.msra.mxu0 %v122
    %143 = vmatprep.subr.mxu0 0.0
    %144 = vmatpush1.msra.mxu0 %v123
    %145 = vmatprep.subr.mxu0 0.0
    %146 = vmatpush1.msra.mxu0 %v124
    %147 = vmatprep.subr.mxu0 0.0
    %148 = vmatpush1.msra.mxu0 %v125
    %149 = vmatprep.subr.mxu0 0.0
    %150 = vmatpush1.msra.mxu0 %v126
    %151 = vmatprep.subr.mxu0 0.0
    %152 = vmatpush1.msra.mxu0 %v127
    %153 = vmatprep.subr.mxu0 0.0
    %154 = vmatpush1.msra.mxu0 %v128
    %155 = vmatprep.subr.mxu0 0.0
    %156 = vmatpush1.msra.mxu0 %v129
    %157 = vmatprep.subr.mxu0 0.0
    %158 = vmatpush1.msra.mxu0 %v130
    %159 = vmatprep.subr.mxu0 0.0
    %160 = vmatpush1.msra.mxu0 %v131
    %161 = vmatprep.subr.mxu0 0.0
    %162 = vmatpush1.msra.mxu0 %v132
    %163 = vmatprep.subr.mxu0 0.0
    %164 = vmatpush1.msra.mxu0 %v133
    %165 = vmatprep.subr.mxu0 0.0
    %166 = vmatpush1.msra.mxu0 %v134
    %167 = vmatprep.subr.mxu0 0.0
    %168 = vmatpush1.msra.mxu0 0.0
    %169 = vmatprep.subr.mxu0 0.0
    %170 = vmatpush1.msra.mxu0 0.0
    %171 = vmatprep.subr.mxu0 0.0
    %172 = vmatpush1.msra.mxu0 0.0
    %173 = vmatprep.subr.mxu0 0.0
    %174 = vmatpush1.msra.mxu0 0.0
    %175 = vmatprep.subr.mxu0 0.0
    %176 = vmatpush1.msra.mxu0 0.0
    %177 = vmatprep.subr.mxu0 0.0
    %178 = vmatpush1.msra.mxu0 0.0
    %179 = vmatprep.subr.mxu0 0.0
    %180 = vmatpush1.msra.mxu0 0.0
    %181 = vmatprep.subr.mxu0 0.0
    %182 = vmatpush1.msra.mxu0 0.0
    %183 = vmatprep.subr.mxu0 0.0
    %184 = vmatpush1.msra.mxu0 0.0
    %185 = vmatprep.subr.mxu0 0.0
    %186 = vmatpush1.msra.mxu0 0.0
    %187 = vmatprep.subr.mxu0 0.0
    %188 = vmatpush1.msra.mxu0 0.0
    %189 = vmatprep.subr.mxu0 0.0
    %190 = vmatpush1.msra.mxu0 0.0
    %191 = vmatprep.subr.mxu0 0.0
    %192 = vmatpush1.msra.mxu0 0.0
    %193 = vmatprep.subr.mxu0 0.0
    %194 = vmatpush1.msra.mxu0 0.0
    %195 = vmatprep.subr.mxu0 0.0
    %196 = vmatpush1.msra.mxu0 0.0
    %197 = vmatprep.subr.mxu0 0.0
    %198 = vmatpush1.msra.mxu0 0.0
    %199 = vmatprep.mubr.f32.mxu0 0.0
    %200 = vmatmul.mubr.f32.gmra.mrb[0].mxu0 %v111
    %v201 = vpop.f32.mrb[0].mxu0
    %v202 = vadd.f32 0.0, %v201
    %v203 = vpop.f32.mrb[0].mxu0
    %204 = vmatprep.mubr.f32.mxu0 0.0
    %205 = vmatmul.mubr.f32.gmra.mrb[0].mxu0 %v112
    %v206 = vpop.f32.mrb[0].mxu0
    %v207 = vadd.f32 0.0, %v206
    %v208 = vpop.f32.mrb[0].mxu0
    %209 = vmatprep.mubr.f32.mxu0 0.0
    %210 = vmatmul.mubr.f32.gmra.mrb[0].mxu0 %v113
    %v211 = vpop.f32.mrb[0].mxu0
    %v212 = vadd.f32 0.0, %v211
    %v213 = vpop.f32.mrb[0].mxu0
    %214 = vmatprep.mubr.f32.mxu0 0.0
    %215 = vmatmul.mubr.f32.gmra.mrb[0].mxu0 %v114
    %v216 = vpop.f32.mrb[0].mxu0
    %v217 = vadd.f32 0.0, %v216
    %v218 = vpop.f32.mrb[0].mxu0
    %219 = vmatprep.mubr.f32.mxu0 0.0
    %220 = vmatmul.mubr.f32.gmra.mrb[0].mxu0 %v115
    %v221 = vpop.f32.mrb[0].mxu0
    %v222 = vadd.f32 0.0, %v221
    %v223 = vpop.f32.mrb[0].mxu0
    %224 = vmatprep.mubr.f32.mxu0 0.0
    %225 = vmatmul.mubr.f32.gmra.mrb[0].mxu0 %v116
    %v226 = vpop.f32.mrb[0].mxu0
    %v227 = vadd.f32 0.0, %v226
    %v228 = vpop.f32.mrb[0].mxu0
    %229 = vmatprep.mubr.f32.mxu0 0.0
    %230 = vmatmul.mubr.f32.gmra.mrb[0].mxu0 %v117
    %v231 = vpop.f32.mrb[0].mxu0
    %v232 = vadd.f32 0.0, %v231
    %v233 = vpop.f32.mrb[0].mxu0
    %234 = vmatprep.mubr.f32.mxu0 0.0
    %235 = vmatmul.mubr.f32.gmra.mrb[0].mxu0 %v118
    %v236 = vpop.f32.mrb[0].mxu0
    %v237 = vadd.f32 0.0, %v236
    %v238 = vpop.f32.mrb[0].mxu0
    %239 = vdwg.mxu0
    %v240 = vld [vmem:[%s2] sm:$0xff]
    %v241 = vld [vmem:[%s2 + $0x8] sm:$0xff]
    %v242 = vld [vmem:[%s2 + $0x10] sm:$0xff]
    %v243 = vld [vmem:[%s2 + $0x18] sm:$0xff]
    %v244 = vld [vmem:[%s2 + $0x20] sm:$0xff]
    %v245 = vld [vmem:[%s2 + $0x28] sm:$0xff]
    %v246 = vld [vmem:[%s2 + $0x30] sm:$0xff]
    %v247 = vld [vmem:[%s2 + $0x38] sm:$0xff]
    %v248 = vld [vmem:[%s2 + $0x40] sm:$0xff]
    %v249 = vld [vmem:[%s2 + $0x48] sm:$0xff]
    %v250 = vld [vmem:[%s2 + $0x50] sm:$0xff]
    %v251 = vld [vmem:[%s2 + $0x58] sm:$0xff]
    %v252 = vld [vmem:[%s2 + $0x60] sm:$0xff]
    %v253 = vld [vmem:[%s2 + $0x68] sm:$0xff]
    %v254 = vld [vmem:[%s2 + $0x70] sm:$0xff]
    %v255 = vld [vmem:[%s2 + $0x78] sm:$0xff]
    %v256 = vld [vmem:[%s4] sm:$0xf]
    %v258 = vlaneseq
    %v259 = vshrl.u32 %v258, 7
    %v260 = vsub.s32 0, %v259
    %v261 = vrot.slane %v256, %v260
    %v262 = vlaneseq
    %v263 = vshrl.u32 %v262, 7
    %v264 = vsub.s32 1, %v263
    %v265 = vrot.slane %v256, %v264
    %v266 = vlaneseq
    %v267 = vshrl.u32 %v266, 7
    %v268 = vsub.s32 2, %v267
    %v269 = vrot.slane %v256, %v268
    %v270 = vlaneseq
    %v271 = vshrl.u32 %v270, 7
    %v272 = vsub.s32 3, %v271
    %v273 = vrot.slane %v256, %v272
    %vm278 = vcmask 261120
    %v280 = vsel %vm278, %v202, 0
    %v283 = vsel %vm278, %v207, 0
    %v286 = vsel %vm278, %v212, 0
    %v289 = vsel %vm278, %v217, 0
    %v292 = vsel %vm278, %v222, 0
    %v295 = vsel %vm278, %v227, 0
    %v298 = vsel %vm278, %v232, 0
    %v301 = vsel %vm278, %v237, 0
    %303 = vmatprep.subr.mxu0 %v241
    %304 = vmatpush1.msra.mxu0 %v240
    %305 = vmatprep.subr.mxu0 %v245
    %306 = vmatpush1.msra.mxu0 %v244
    %307 = vmatprep.subr.mxu0 %v249
    %308 = vmatpush1.msra.mxu0 %v248
    %309 = vmatprep.subr.mxu0 %v253
    %310 = vmatpush1.msra.mxu0 %v252
    %311 = vmatprep.subr.mxu0 0.0
    %312 = vmatpush1.msra.mxu0 0.0
    %313 = vmatprep.subr.mxu0 0.0
    %314 = vmatpush1.msra.mxu0 0.0
    %315 = vmatprep.subr.mxu0 0.0
    %316 = vmatpush1.msra.mxu0 0.0
    %317 = vmatprep.subr.mxu0 0.0
    %318 = vmatpush1.msra.mxu0 0.0
    %319 = vmatprep.subr.mxu0 0.0
    %320 = vmatpush1.msra.mxu0 0.0
    %321 = vmatprep.subr.mxu0 0.0
    %322 = vmatpush1.msra.mxu0 0.0
    %323 = vmatprep.subr.mxu0 0.0
    %324 = vmatpush1.msra.mxu0 0.0
    %325 = vmatprep.subr.mxu0 0.0
    %326 = vmatpush1.msra.mxu0 0.0
    %327 = vmatprep.subr.mxu0 0.0
    %328 = vmatpush1.msra.mxu0 0.0
    %329 = vmatprep.subr.mxu0 0.0
    %330 = vmatpush1.msra.mxu0 0.0
    %331 = vmatprep.subr.mxu0 0.0
    %332 = vmatpush1.msra.mxu0 0.0
    %333 = vmatprep.subr.mxu0 0.0
    %334 = vmatpush1.msra.mxu0 0.0
    %335 = vmatprep.subr.mxu0 0.0
    %336 = vmatpush1.msra.mxu0 0.0
    %337 = vmatprep.subr.mxu0 0.0
    %338 = vmatpush1.msra.mxu0 0.0
    %339 = vmatprep.subr.mxu0 0.0
    %340 = vmatpush1.msra.mxu0 0.0
    %341 = vmatprep.subr.mxu0 0.0
    %342 = vmatpush1.msra.mxu0 0.0
    %343 = vmatprep.subr.mxu0 0.0
    %344 = vmatpush1.msra.mxu0 0.0
    %345 = vmatprep.subr.mxu0 0.0
    %346 = vmatpush1.msra.mxu0 0.0
    %347 = vmatprep.subr.mxu0 0.0
    %348 = vmatpush1.msra.mxu0 0.0
    %349 = vmatprep.subr.mxu0 0.0
    %350 = vmatpush1.msra.mxu0 0.0
    %351 = vmatprep.subr.mxu0 0.0
    %352 = vmatpush1.msra.mxu0 0.0
    %353 = vmatprep.subr.mxu0 0.0
    %354 = vmatpush1.msra.mxu0 0.0
    %355 = vmatprep.subr.mxu0 0.0
    %356 = vmatpush1.msra.mxu0 0.0
    %357 = vmatprep.subr.mxu0 0.0
    %358 = vmatpush1.msra.mxu0 0.0
    %359 = vmatprep.subr.mxu0 0.0
    %360 = vmatpush1.msra.mxu0 0.0
    %361 = vmatprep.subr.mxu0 0.0
    %362 = vmatpush1.msra.mxu0 0.0
    %363 = vmatprep.subr.mxu0 0.0
    %364 = vmatpush1.msra.mxu0 0.0
    %365 = vmatprep.subr.mxu0 0.0
    %366 = vmatpush1.msra.mxu0 0.0
    %367 = vmatprep.mubr.f32.mxu0 0.0
    %368 = vmatmul.mubr.f32.gmra.mrb[0].mxu0 %v280
    %v369 = vpop.f32.mrb[0].mxu0
    %v370 = vadd.f32 %v261, %v369
    %v371 = vpop.f32.mrb[0].mxu0
    %v372 = vadd.f32 %v265, %v371
    %373 = vmatprep.mubr.f32.mxu0 0.0
    %374 = vmatmul.mubr.f32.gmra.mrb[0].mxu0 %v283
    %v375 = vpop.f32.mrb[0].mxu0
    %v376 = vadd.f32 %v261, %v375
    %v377 = vpop.f32.mrb[0].mxu0
    %v378 = vadd.f32 %v265, %v377
    %379 = vmatprep.mubr.f32.mxu0 0.0
    %380 = vmatmul.mubr.f32.gmra.mrb[0].mxu0 %v286
    %v381 = vpop.f32.mrb[0].mxu0
    %v382 = vadd.f32 %v261, %v381
    %v383 = vpop.f32.mrb[0].mxu0
    %v384 = vadd.f32 %v265, %v383
    %385 = vmatprep.mubr.f32.mxu0 0.0
    %386 = vmatmul.mubr.f32.gmra.mrb[0].mxu0 %v289
    %v387 = vpop.f32.mrb[0].mxu0
    %v388 = vadd.f32 %v261, %v387
    %v389 = vpop.f32.mrb[0].mxu0
    %v390 = vadd.f32 %v265, %v389
    %391 = vmatprep.mubr.f32.mxu0 0.0
    %392 = vmatmul.mubr.f32.gmra.mrb[0].mxu0 %v292
    %v393 = vpop.f32.mrb[0].mxu0
    %v394 = vadd.f32 %v261, %v393
    %v395 = vpop.f32.mrb[0].mxu0
    %v396 = vadd.f32 %v265, %v395
    %397 = vmatprep.mubr.f32.mxu0 0.0
    %398 = vmatmul.mubr.f32.gmra.mrb[0].mxu0 %v295
    %v399 = vpop.f32.mrb[0].mxu0
    %v400 = vadd.f32 %v261, %v399
    %v401 = vpop.f32.mrb[0].mxu0
    %v402 = vadd.f32 %v265, %v401
    %403 = vmatprep.mubr.f32.mxu0 0.0
    %404 = vmatmul.mubr.f32.gmra.mrb[0].mxu0 %v298
    %v405 = vpop.f32.mrb[0].mxu0
    %v406 = vadd.f32 %v261, %v405
    %v407 = vpop.f32.mrb[0].mxu0
    %v408 = vadd.f32 %v265, %v407
    %409 = vmatprep.mubr.f32.mxu0 0.0
    %410 = vmatmul.mubr.f32.gmra.mrb[0].mxu0 %v301
    %v411 = vpop.f32.mrb[0].mxu0
    %v412 = vadd.f32 %v261, %v411
    %v413 = vpop.f32.mrb[0].mxu0
    %v414 = vadd.f32 %v265, %v413
    %415 = vdwg.mxu0
    %416 = vmatprep.subr.mxu0 %v243
    %417 = vmatpush1.msra.mxu0 %v242
    %418 = vmatprep.subr.mxu0 %v247
    %419 = vmatpush1.msra.mxu0 %v246
    %420 = vmatprep.subr.mxu0 %v251
    %421 = vmatpush1.msra.mxu0 %v250
    %422 = vmatprep.subr.mxu0 %v255
    %423 = vmatpush1.msra.mxu0 %v254
    %424 = vmatprep.subr.mxu0 0.0
    %425 = vmatpush1.msra.mxu0 0.0
    %426 = vmatprep.subr.mxu0 0.0
    %427 = vmatpush1.msra.mxu0 0.0
    %428 = vmatprep.subr.mxu0 0.0
    %429 = vmatpush1.msra.mxu0 0.0
    %430 = vmatprep.subr.mxu0 0.0
    %431 = vmatpush1.msra.mxu0 0.0
    %432 = vmatprep.subr.mxu0 0.0
    %433 = vmatpush1.msra.mxu0 0.0
    %434 = vmatprep.subr.mxu0 0.0
    %435 = vmatpush1.msra.mxu0 0.0
    %436 = vmatprep.subr.mxu0 0.0
    %437 = vmatpush1.msra.mxu0 0.0
    %438 = vmatprep.subr.mxu0 0.0
    %439 = vmatpush1.msra.mxu0 0.0
    %440 = vmatprep.subr.mxu0 0.0
    %441 = vmatpush1.msra.mxu0 0.0
    %442 = vmatprep.subr.mxu0 0.0
    %443 = vmatpush1.msra.mxu0 0.0
    %444 = vmatprep.subr.mxu0 0.0
    %445 = vmatpush1.msra.mxu0 0.0
    %446 = vmatprep.subr.mxu0 0.0
    %447 = vmatpush1.msra.mxu0 0.0
    %448 = vmatprep.subr.mxu0 0.0
    %449 = vmatpush1.msra.mxu0 0.0
    %450 = vmatprep.subr.mxu0 0.0
    %451 = vmatpush1.msra.mxu0 0.0
    %452 = vmatprep.subr.mxu0 0.0
    %453 = vmatpush1.msra.mxu0 0.0
    %454 = vmatprep.subr.mxu0 0.0
    %455 = vmatpush1.msra.mxu0 0.0
    %456 = vmatprep.subr.mxu0 0.0
    %457 = vmatpush1.msra.mxu0 0.0
    %458 = vmatprep.subr.mxu0 0.0
    %459 = vmatpush1.msra.mxu0 0.0
    %460 = vmatprep.subr.mxu0 0.0
    %461 = vmatpush1.msra.mxu0 0.0
    %462 = vmatprep.subr.mxu0 0.0
    %463 = vmatpush1.msra.mxu0 0.0
    %464 = vmatprep.subr.mxu0 0.0
    %465 = vmatpush1.msra.mxu0 0.0
    %466 = vmatprep.subr.mxu0 0.0
    %467 = vmatpush1.msra.mxu0 0.0
    %468 = vmatprep.subr.mxu0 0.0
    %469 = vmatpush1.msra.mxu0 0.0
    %470 = vmatprep.subr.mxu0 0.0
    %471 = vmatpush1.msra.mxu0 0.0
    %472 = vmatprep.subr.mxu0 0.0
    %473 = vmatpush1.msra.mxu0 0.0
    %474 = vmatprep.subr.mxu0 0.0
    %475 = vmatpush1.msra.mxu0 0.0
    %476 = vmatprep.subr.mxu0 0.0
    %477 = vmatpush1.msra.mxu0 0.0
    %478 = vmatprep.subr.mxu0 0.0
    %479 = vmatpush1.msra.mxu0 0.0
    %480 = vmatprep.mubr.f32.mxu0 0.0
    %481 = vmatmul.mubr.f32.gmra.mrb[0].mxu0 %v280
    %v482 = vpop.f32.mrb[0].mxu0
    %v483 = vadd.f32 %v269, %v482
    %v484 = vpop.f32.mrb[0].mxu0
    %v485 = vadd.f32 %v273, %v484
    %486 = vmatprep.mubr.f32.mxu0 0.0
    %487 = vmatmul.mubr.f32.gmra.mrb[0].mxu0 %v283
    %v488 = vpop.f32.mrb[0].mxu0
    %v489 = vadd.f32 %v269, %v488
    %v490 = vpop.f32.mrb[0].mxu0
    %v491 = vadd.f32 %v273, %v490
    %492 = vmatprep.mubr.f32.mxu0 0.0
    %493 = vmatmul.mubr.f32.gmra.mrb[0].mxu0 %v286
    %v494 = vpop.f32.mrb[0].mxu0
    %v495 = vadd.f32 %v269, %v494
    %v496 = vpop.f32.mrb[0].mxu0
    %v497 = vadd.f32 %v273, %v496
    %498 = vmatprep.mubr.f32.mxu0 0.0
    %499 = vmatmul.mubr.f32.gmra.mrb[0].mxu0 %v289
    %v500 = vpop.f32.mrb[0].mxu0
    %v501 = vadd.f32 %v269, %v500
    %v502 = vpop.f32.mrb[0].mxu0
    %v503 = vadd.f32 %v273, %v502
    %504 = vmatprep.mubr.f32.mxu0 0.0
    %505 = vmatmul.mubr.f32.gmra.mrb[0].mxu0 %v292
    %v506 = vpop.f32.mrb[0].mxu0
    %v507 = vadd.f32 %v269, %v506
    %v508 = vpop.f32.mrb[0].mxu0
    %v509 = vadd.f32 %v273, %v508
    %510 = vmatprep.mubr.f32.mxu0 0.0
    %511 = vmatmul.mubr.f32.gmra.mrb[0].mxu0 %v295
    %v512 = vpop.f32.mrb[0].mxu0
    %v513 = vadd.f32 %v269, %v512
    %v514 = vpop.f32.mrb[0].mxu0
    %v515 = vadd.f32 %v273, %v514
    %516 = vmatprep.mubr.f32.mxu0 0.0
    %517 = vmatmul.mubr.f32.gmra.mrb[0].mxu0 %v298
    %v518 = vpop.f32.mrb[0].mxu0
    %v519 = vadd.f32 %v269, %v518
    %v520 = vpop.f32.mrb[0].mxu0
    %v521 = vadd.f32 %v273, %v520
    %522 = vmatprep.mubr.f32.mxu0 0.0
    %523 = vmatmul.mubr.f32.gmra.mrb[0].mxu0 %v301
    %v524 = vpop.f32.mrb[0].mxu0
    %v525 = vadd.f32 %v269, %v524
    %v526 = vpop.f32.mrb[0].mxu0
    %v527 = vadd.f32 %v273, %v526
    %528 = vdwg.mxu0
    %v529 = vld [vmem:[#allocation2] sm:$0xff]
    %v530 = vld [vmem:[#allocation2 + $0x8] sm:$0xff]
    %v531 = vld [vmem:[#allocation2 + $0x10] sm:$0xff]
    %v532 = vld [vmem:[#allocation2 + $0x18] sm:$0xff]
    %v533 = vld [vmem:[#allocation2 + $0x20] sm:$0xff]
    %v534 = vld [vmem:[#allocation2 + $0x28] sm:$0xff]
    %v535 = vld [vmem:[#allocation2 + $0x30] sm:$0xff]
    %v536 = vld [vmem:[#allocation2 + $0x38] sm:$0xff]
    %v537 = vld [vmem:[#allocation2 + $0x40] sm:$0xff]
    %v538 = vld [vmem:[#allocation2 + $0x48] sm:$0xff]
    %v539 = vld [vmem:[#allocation2 + $0x50] sm:$0xff]
    %v540 = vld [vmem:[#allocation2 + $0x58] sm:$0xff]
    %v541 = vld [vmem:[#allocation2 + $0x60] sm:$0xff]
    %v542 = vld [vmem:[#allocation2 + $0x68] sm:$0xff]
    %v543 = vld [vmem:[#allocation2 + $0x70] sm:$0xff]
    %v544 = vld [vmem:[#allocation2 + $0x78] sm:$0xff]
    %v545 = vld [vmem:[#allocation2 + $0x80] sm:$0xff]
    %v546 = vld [vmem:[#allocation2 + $0x88] sm:$0xff]
    %v547 = vld [vmem:[#allocation2 + $0x90] sm:$0xff]
    %v548 = vld [vmem:[#allocation2 + $0x98] sm:$0xff]
    %v549 = vld [vmem:[#allocation2 + $0xa0] sm:$0xff]
    %v550 = vld [vmem:[#allocation2 + $0xa8] sm:$0xff]
    %v551 = vld [vmem:[#allocation2 + $0xb0] sm:$0xff]
    %v552 = vld [vmem:[#allocation2 + $0xb8] sm:$0xff]
    %v553 = vld [vmem:[#allocation2 + $0xc0] sm:$0xff]
    %v554 = vld [vmem:[#allocation2 + $0xc8] sm:$0xff]
    %v555 = vld [vmem:[#allocation2 + $0xd0] sm:$0xff]
    %v556 = vld [vmem:[#allocation2 + $0xd8] sm:$0xff]
    %v557 = vld [vmem:[#allocation2 + $0xe0] sm:$0xff]
    %v558 = vld [vmem:[#allocation2 + $0xe8] sm:$0xff]
    %v559 = vld [vmem:[#allocation2 + $0xf0] sm:$0xff]
    %v560 = vld [vmem:[#allocation2 + $0xf8] sm:$0xff]
    %v561 = vld [vmem:[#allocation2 + $0x100] sm:$0xff]
    %v562 = vld [vmem:[#allocation2 + $0x108] sm:$0xff]
    %v563 = vld [vmem:[#allocation2 + $0x110] sm:$0xff]
    %v564 = vld [vmem:[#allocation2 + $0x118] sm:$0xff]
    %v565 = vld [vmem:[#allocation2 + $0x120] sm:$0xff]
    %v566 = vld [vmem:[#allocation2 + $0x128] sm:$0xff]
    %v567 = vld [vmem:[#allocation2 + $0x130] sm:$0xff]
    %v568 = vld [vmem:[#allocation2 + $0x138] sm:$0xff]
    %v569 = vld [vmem:[#allocation2 + $0x140] sm:$0xff]
    %v570 = vld [vmem:[#allocation2 + $0x148] sm:$0xff]
    %v571 = vld [vmem:[#allocation2 + $0x150] sm:$0xff]
    %v572 = vld [vmem:[#allocation2 + $0x158] sm:$0xff]
    %v573 = vld [vmem:[#allocation2 + $0x160] sm:$0xff]
    %v574 = vld [vmem:[#allocation2 + $0x168] sm:$0xff]
    %v575 = vld [vmem:[#allocation2 + $0x170] sm:$0xff]
    %v576 = vld [vmem:[#allocation2 + $0x178] sm:$0xff]
    %v577 = vld [vmem:[#allocation2 + $0x180] sm:$0xff]
    %v578 = vld [vmem:[#allocation2 + $0x188] sm:$0xff]
    %v579 = vld [vmem:[#allocation2 + $0x190] sm:$0xff]
    %v580 = vld [vmem:[#allocation2 + $0x198] sm:$0xff]
    %v581 = vld [vmem:[#allocation2 + $0x1a0] sm:$0xff]
    %v582 = vld [vmem:[#allocation2 + $0x1a8] sm:$0xff]
    %v583 = vld [vmem:[#allocation2 + $0x1b0] sm:$0xff]
    %v584 = vld [vmem:[#allocation2 + $0x1b8] sm:$0xff]
    %v585 = vld [vmem:[#allocation2 + $0x1c0] sm:$0xff]
    %v586 = vld [vmem:[#allocation2 + $0x1c8] sm:$0xff]
    %v587 = vld [vmem:[#allocation2 + $0x1d0] sm:$0xff]
    %v588 = vld [vmem:[#allocation2 + $0x1d8] sm:$0xff]
    %v589 = vld [vmem:[#allocation2 + $0x1e0] sm:$0xff]
    %v590 = vld [vmem:[#allocation2 + $0x1e8] sm:$0xff]
    %v591 = vld [vmem:[#allocation2 + $0x1f0] sm:$0xff]
    %v592 = vld [vmem:[#allocation2 + $0x1f8] sm:$0xff]
    %593 = vmatprep.subr.mxu0 %v530
    %594 = vmatpush1.msra.mxu0 %v529
    %595 = vmatprep.subr.mxu0 %v534
    %596 = vmatpush1.msra.mxu0 %v533
    %597 = vmatprep.subr.mxu0 %v538
    %598 = vmatpush1.msra.mxu0 %v537
    %599 = vmatprep.subr.mxu0 %v542
    %600 = vmatpush1.msra.mxu0 %v541
    %601 = vmatprep.subr.mxu0 %v546
    %602 = vmatpush1.msra.mxu0 %v545
    %603 = vmatprep.subr.mxu0 %v550
    %604 = vmatpush1.msra.mxu0 %v549
    %605 = vmatprep.subr.mxu0 %v554
    %606 = vmatpush1.msra.mxu0 %v553
    %607 = vmatprep.subr.mxu0 %v558
    %608 = vmatpush1.msra.mxu0 %v557
    %609 = vmatprep.subr.mxu0 %v562
    %610 = vmatpush1.msra.mxu0 %v561
    %611 = vmatprep.subr.mxu0 %v566
    %612 = vmatpush1.msra.mxu0 %v565
    %613 = vmatprep.subr.mxu0 %v570
    %614 = vmatpush1.msra.mxu0 %v569
    %615 = vmatprep.subr.mxu0 %v574
    %616 = vmatpush1.msra.mxu0 %v573
    %617 = vmatprep.subr.mxu0 %v578
    %618 = vmatpush1.msra.mxu0 %v577
    %619 = vmatprep.subr.mxu0 %v582
    %620 = vmatpush1.msra.mxu0 %v581
    %621 = vmatprep.subr.mxu0 %v586
    %622 = vmatpush1.msra.mxu0 %v585
    %623 = vmatprep.subr.mxu0 %v590
    %624 = vmatpush1.msra.mxu0 %v589
    %625 = vmatprep.subr.mxu0 0.0
    %626 = vmatpush1.msra.mxu0 0.0
    %627 = vmatprep.subr.mxu0 0.0
    %628 = vmatpush1.msra.mxu0 0.0
    %629 = vmatprep.subr.mxu0 0.0
    %630 = vmatpush1.msra.mxu0 0.0
    %631 = vmatprep.subr.mxu0 0.0
    %632 = vmatpush1.msra.mxu0 0.0
    %633 = vmatprep.subr.mxu0 0.0
    %634 = vmatpush1.msra.mxu0 0.0
    %635 = vmatprep.subr.mxu0 0.0
    %636 = vmatpush1.msra.mxu0 0.0
    %637 = vmatprep.subr.mxu0 0.0
    %638 = vmatpush1.msra.mxu0 0.0
    %639 = vmatprep.subr.mxu0 0.0
    %640 = vmatpush1.msra.mxu0 0.0
    %641 = vmatprep.subr.mxu0 0.0
    %642 = vmatpush1.msra.mxu0 0.0
    %643 = vmatprep.subr.mxu0 0.0
    %644 = vmatpush1.msra.mxu0 0.0
    %645 = vmatprep.subr.mxu0 0.0
    %646 = vmatpush1.msra.mxu0 0.0
    %647 = vmatprep.subr.mxu0 0.0
    %648 = vmatpush1.msra.mxu0 0.0
    %649 = vmatprep.subr.mxu0 0.0
    %650 = vmatpush1.msra.mxu0 0.0
    %651 = vmatprep.subr.mxu0 0.0
    %652 = vmatpush1.msra.mxu0 0.0
    %653 = vmatprep.subr.mxu0 0.0
    %654 = vmatpush1.msra.mxu0 0.0
    %655 = vmatprep.subr.mxu0 0.0
    %656 = vmatpush1.msra.mxu0 0.0
    %657 = vmatprep.mubr.f32.mxu0 0.0
    %658 = vmatmul.mubr.f32.gmra.mrb[0].mxu0 0.0
    %v659 = vpop.f32.mrb[0].mxu0
    %v660 = vadd.f32 0.0, %v659
    %v661 = vpop.f32.mrb[0].mxu0
    %v662 = vadd.f32 0.0, %v661
    %663 = vdwg.mxu0
    %664 = vmatprep.subr.mxu0 %v532
    %665 = vmatpush1.msra.mxu0 %v531
    %666 = vmatprep.subr.mxu0 %v536
    %667 = vmatpush1.msra.mxu0 %v535
    %668 = vmatprep.subr.mxu0 %v540
    %669 = vmatpush1.msra.mxu0 %v539
    %670 = vmatprep.subr.mxu0 %v544
    %671 = vmatpush1.msra.mxu0 %v543
    %672 = vmatprep.subr.mxu0 %v548
    %673 = vmatpush1.msra.mxu0 %v547
    %674 = vmatprep.subr.mxu0 %v552
    %675 = vmatpush1.msra.mxu0 %v551
    %676 = vmatprep.subr.mxu0 %v556
    %677 = vmatpush1.msra.mxu0 %v555
    %678 = vmatprep.subr.mxu0 %v560
    %679 = vmatpush1.msra.mxu0 %v559
    %680 = vmatprep.subr.mxu0 %v564
    %681 = vmatpush1.msra.mxu0 %v563
    %682 = vmatprep.subr.mxu0 %v568
    %683 = vmatpush1.msra.mxu0 %v567
    %684 = vmatprep.subr.mxu0 %v572
    %685 = vmatpush1.msra.mxu0 %v571
    %686 = vmatprep.subr.mxu0 %v576
    %687 = vmatpush1.msra.mxu0 %v575
    %688 = vmatprep.subr.mxu0 %v580
    %689 = vmatpush1.msra.mxu0 %v579
    %690 = vmatprep.subr.mxu0 %v584
    %691 = vmatpush1.msra.mxu0 %v583
    %692 = vmatprep.subr.mxu0 %v588
    %693 = vmatpush1.msra.mxu0 %v587
    %694 = vmatprep.subr.mxu0 %v592
    %695 = vmatpush1.msra.mxu0 %v591
    %696 = vmatprep.subr.mxu0 0.0
    %697 = vmatpush1.msra.mxu0 0.0
    %698 = vmatprep.subr.mxu0 0.0
    %699 = vmatpush1.msra.mxu0 0.0
    %700 = vmatprep.subr.mxu0 0.0
    %701 = vmatpush1.msra.mxu0 0.0
    %702 = vmatprep.subr.mxu0 0.0
    %703 = vmatpush1.msra.mxu0 0.0
    %704 = vmatprep.subr.mxu0 0.0
    %705 = vmatpush1.msra.mxu0 0.0
    %706 = vmatprep.subr.mxu0 0.0
    %707 = vmatpush1.msra.mxu0 0.0
    %708 = vmatprep.subr.mxu0 0.0
    %709 = vmatpush1.msra.mxu0 0.0
    %710 = vmatprep.subr.mxu0 0.0
    %711 = vmatpush1.msra.mxu0 0.0
    %712 = vmatprep.subr.mxu0 0.0
    %713 = vmatpush1.msra.mxu0 0.0
    %714 = vmatprep.subr.mxu0 0.0
    %715 = vmatpush1.msra.mxu0 0.0
    %716 = vmatprep.subr.mxu0 0.0
    %717 = vmatpush1.msra.mxu0 0.0
    %718 = vmatprep.subr.mxu0 0.0
    %719 = vmatpush1.msra.mxu0 0.0
    %720 = vmatprep.subr.mxu0 0.0
    %721 = vmatpush1.msra.mxu0 0.0
    %722 = vmatprep.subr.mxu0 0.0
    %723 = vmatpush1.msra.mxu0 0.0
    %724 = vmatprep.subr.mxu0 0.0
    %725 = vmatpush1.msra.mxu0 0.0
    %726 = vmatprep.subr.mxu0 0.0
    %727 = vmatpush1.msra.mxu0 0.0
    %728 = vmatprep.mubr.f32.mxu0 0.0
    %729 = vmatmul.mubr.f32.gmra.mrb[0].mxu0 0.0
    %v730 = vpop.f32.mrb[0].mxu0
    %v731 = vadd.f32 0.0, %v730
    %v732 = vpop.f32.mrb[0].mxu0
    %v733 = vadd.f32 0.0, %v732
    %734 = vdwg.mxu0
    %v735 = vadd.f32 %v370, %v660
    %v736 = vadd.f32 %v372, %v662
    %v737 = vadd.f32 %v483, %v731
    %v738 = vadd.f32 %v485, %v733
    %v739 = vxor.u32 %v735, 2147483648
    %v740 = vmul.f32 %v739, 1.442695
    %v741 = vpow.pop %v740
    %v742 = vadd.f32 %v741, 1.0
    %v743 = vrcp.pop %v742
    %v744 = vmul.f32 1.0, %v743
    %v745 = vxor.u32 %v736, 2147483648
    %v746 = vmul.f32 %v745, 1.442695
    %v747 = vpow.pop %v746
    %v748 = vadd.f32 %v747, 1.0
    %v749 = vrcp.pop %v748
    %v750 = vmul.f32 1.0, %v749
    %v751 = vtanh.pop %v737
    %v752 = vxor.u32 %v738, 2147483648
    %v753 = vmul.f32 %v752, 1.442695
    %v754 = vpow.pop %v753
    %v755 = vadd.f32 %v754, 1.0
    %v756 = vrcp.pop %v755
    %v757 = vmul.f32 1.0, %v756
    %v758 = vmul.f32 %v750, 0.0
    %v759 = vmul.f32 %v744, %v751
    %v760 = vadd.f32 %v758, %v759
    %v761 = vtanh.pop %v760
    %v762 = vmul.f32 %v757, %v761
    %763 = vmatprep.subr.mxu0 %v530
    %764 = vmatpush1.msra.mxu0 %v529
    %765 = vmatprep.subr.mxu0 %v534
    %766 = vmatpush1.msra.mxu0 %v533
    %767 = vmatprep.subr.mxu0 %v538
    %768 = vmatpush1.msra.mxu0 %v537
    %769 = vmatprep.subr.mxu0 %v542
    %770 = vmatpush1.msra.mxu0 %v541
    %771 = vmatprep.subr.mxu0 %v546
    %772 = vmatpush1.msra.mxu0 %v545
    %773 = vmatprep.subr.mxu0 %v550
    %774 = vmatpush1.msra.mxu0 %v549
    %775 = vmatprep.subr.mxu0 %v554
    %776 = vmatpush1.msra.mxu0 %v553
    %777 = vmatprep.subr.mxu0 %v558
    %778 = vmatpush1.msra.mxu0 %v557
    %779 = vmatprep.subr.mxu0 %v562
    %780 = vmatpush1.msra.mxu0 %v561
    %781 = vmatprep.subr.mxu0 %v566
    %782 = vmatpush1.msra.mxu0 %v565
    %783 = vmatprep.subr.mxu0 %v570
    %784 = vmatpush1.msra.mxu0 %v569
    %785 = vmatprep.subr.mxu0 %v574
    %786 = vmatpush1.msra.mxu0 %v573
    %787 = vmatprep.subr.mxu0 %v578
    %788 = vmatpush1.msra.mxu0 %v577
    %789 = vmatprep.subr.mxu0 %v582
    %790 = vmatpush1.msra.mxu0 %v581
    %791 = vmatprep.subr.mxu0 %v586
    %792 = vmatpush1.msra.mxu0 %v585
    %793 = vmatprep.subr.mxu0 %v590
    %794 = vmatpush1.msra.mxu0 %v589
    %795 = vmatprep.subr.mxu0 0.0
    %796 = vmatpush1.msra.mxu0 0.0
    %797 = vmatprep.subr.mxu0 0.0
    %798 = vmatpush1.msra.mxu0 0.0
    %799 = vmatprep.subr.mxu0 0.0
    %800 = vmatpush1.msra.mxu0 0.0
    %801 = vmatprep.subr.mxu0 0.0
    %802 = vmatpush1.msra.mxu0 0.0
    %803 = vmatprep.subr.mxu0 0.0
    %804 = vmatpush1.msra.mxu0 0.0
    %805 = vmatprep.subr.mxu0 0.0
    %806 = vmatpush1.msra.mxu0 0.0
    %807 = vmatprep.subr.mxu0 0.0
    %808 = vmatpush1.msra.mxu0 0.0
    %809 = vmatprep.subr.mxu0 0.0
    %810 = vmatpush1.msra.mxu0 0.0
    %811 = vmatprep.subr.mxu0 0.0
    %812 = vmatpush1.msra.mxu0 0.0
    %813 = vmatprep.subr.mxu0 0.0
    %814 = vmatpush1.msra.mxu0 0.0
    %815 = vmatprep.subr.mxu0 0.0
    %816 = vmatpush1.msra.mxu0 0.0
    %817 = vmatprep.subr.mxu0 0.0
    %818 = vmatpush1.msra.mxu0 0.0
    %819 = vmatprep.subr.mxu0 0.0
    %820 = vmatpush1.msra.mxu0 0.0
    %821 = vmatprep.subr.mxu0 0.0
    %822 = vmatpush1.msra.mxu0 0.0
    %823 = vmatprep.subr.mxu0 0.0
    %824 = vmatpush1.msra.mxu0 0.0
    %825 = vmatprep.subr.mxu0 0.0
    %826 = vmatpush1.msra.mxu0 0.0
    %827 = vmatprep.mubr.f32.mxu0 0.0
    %828 = vmatmul.mubr.f32.gmra.mrb[0].mxu0 %v762
    %v829 = vpop.f32.mrb[0].mxu0
    %v830 = vadd.f32 0.0, %v829
    %v831 = vpop.f32.mrb[0].mxu0
    %v832 = vadd.f32 0.0, %v831
    %833 = vdwg.mxu0
    %834 = vmatprep.subr.mxu0 %v532
    %835 = vmatpush1.msra.mxu0 %v531
    %836 = vmatprep.subr.mxu0 %v536
    %837 = vmatpush1.msra.mxu0 %v535
    %838 = vmatprep.subr.mxu0 %v540
    %839 = vmatpush1.msra.mxu0 %v539
    %840 = vmatprep.subr.mxu0 %v544
    %841 = vmatpush1.msra.mxu0 %v543
    %842 = vmatprep.subr.mxu0 %v548
    %843 = vmatpush1.msra.mxu0 %v547
    %844 = vmatprep.subr.mxu0 %v552
    %845 = vmatpush1.msra.mxu0 %v551
    %846 = vmatprep.subr.mxu0 %v556
    %847 = vmatpush1.msra.mxu0 %v555
    %848 = vmatprep.subr.mxu0 %v560
    %849 = vmatpush1.msra.mxu0 %v559
    %850 = vmatprep.subr.mxu0 %v564
    %851 = vmatpush1.msra.mxu0 %v563
    %852 = vmatprep.subr.mxu0 %v568
    %853 = vmatpush1.msra.mxu0 %v567
    %854 = vmatprep.subr.mxu0 %v572
    %855 = vmatpush1.msra.mxu0 %v571
    %856 = vmatprep.subr.mxu0 %v576
    %857 = vmatpush1.msra.mxu0 %v575
    %858 = vmatprep.subr.mxu0 %v580
    %859 = vmatpush1.msra.mxu0 %v579
    %860 = vmatprep.subr.mxu0 %v584
    %861 = vmatpush1.msra.mxu0 %v583
    %862 = vmatprep.subr.mxu0 %v588
    %863 = vmatpush1.msra.mxu0 %v587
    %864 = vmatprep.subr.mxu0 %v592
    %865 = vmatpush1.msra.mxu0 %v591
    %866 = vmatprep.subr.mxu0 0.0
    %867 = vmatpush1.msra.mxu0 0.0
    %868 = vmatprep.subr.mxu0 0.0
    %869 = vmatpush1.msra.mxu0 0.0
    %870 = vmatprep.subr.mxu0 0.0
    %871 = vmatpush1.msra.mxu0 0.0
    %872 = vmatprep.subr.mxu0 0.0
    %873 = vmatpush1.msra.mxu0 0.0
    %874 = vmatprep.subr.mxu0 0.0
    %875 = vmatpush1.msra.mxu0 0.0
    %876 = vmatprep.subr.mxu0 0.0
    %877 = vmatpush1.msra.mxu0 0.0
    %878 = vmatprep.subr.mxu0 0.0
    %879 = vmatpush1.msra.mxu0 0.0
    %880 = vmatprep.subr.mxu0 0.0
    %881 = vmatpush1.msra.mxu0 0.0
    %882 = vmatprep.subr.mxu0 0.0
    %883 = vmatpush1.msra.mxu0 0.0
    %884 = vmatprep.subr.mxu0 0.0
    %885 = vmatpush1.msra.mxu0 0.0
    %886 = vmatprep.subr.mxu0 0.0
    %887 = vmatpush1.msra.mxu0 0.0
    %888 = vmatprep.subr.mxu0 0.0
    %889 = vmatpush1.msra.mxu0 0.0
    %890 = vmatprep.subr.mxu0 0.0
    %891 = vmatpush1.msra.mxu0 0.0
    %892 = vmatprep.subr.mxu0 0.0
    %893 = vmatpush1.msra.mxu0 0.0
    %894 = vmatprep.subr.mxu0 0.0
    %895 = vmatpush1.msra.mxu0 0.0
    %896 = vmatprep.subr.mxu0 0.0
    %897 = vmatpush1.msra.mxu0 0.0
    %898 = vmatprep.mubr.f32.mxu0 0.0
    %899 = vmatmul.mubr.f32.gmra.mrb[0].mxu0 %v762
    %v900 = vpop.f32.mrb[0].mxu0
    %v901 = vadd.f32 0.0, %v900
    %v902 = vpop.f32.mrb[0].mxu0
    %v903 = vadd.f32 0.0, %v902
    %904 = vdwg.mxu0
    %v905 = vadd.f32 %v376, %v830
    %v906 = vadd.f32 %v378, %v832
    %v907 = vadd.f32 %v489, %v901
    %v908 = vadd.f32 %v491, %v903
    %v909 = vxor.u32 %v905, 2147483648
    %v910 = vmul.f32 %v909, 1.442695
    %v911 = vpow.pop %v910
    %v912 = vadd.f32 %v911, 1.0
    %v913 = vrcp.pop %v912
    %v914 = vmul.f32 1.0, %v913
    %v915 = vxor.u32 %v906, 2147483648
    %v916 = vmul.f32 %v915, 1.442695
    %v917 = vpow.pop %v916
    %v918 = vadd.f32 %v917, 1.0
    %v919 = vrcp.pop %v918
    %v920 = vmul.f32 1.0, %v919
    %v921 = vtanh.pop %v907
    %v922 = vxor.u32 %v908, 2147483648
    %v923 = vmul.f32 %v922, 1.442695
    %v924 = vpow.pop %v923
    %v925 = vadd.f32 %v924, 1.0
    %v926 = vrcp.pop %v925
    %v927 = vmul.f32 1.0, %v926
    %v928 = vmul.f32 %v920, %v760
    %v929 = vmul.f32 %v914, %v921
    %v930 = vadd.f32 %v928, %v929
    %v931 = vtanh.pop %v930
    %v932 = vmul.f32 %v927, %v931
    %933 = vmatprep.subr.mxu0 %v530
    %934 = vmatpush1.msra.mxu0 %v529
    %935 = vmatprep.subr.mxu0 %v534
    %936 = vmatpush1.msra.mxu0 %v533
    %937 = vmatprep.subr.mxu0 %v538
    %938 = vmatpush1.msra.mxu0 %v537
    %939 = vmatprep.subr.mxu0 %v542
    %940 = vmatpush1.msra.mxu0 %v541
    %941 = vmatprep.subr.mxu0 %v546
    %942 = vmatpush1.msra.mxu0 %v545
    %943 = vmatprep.subr.mxu0 %v550
    %944 = vmatpush1.msra.mxu0 %v549
    %945 = vmatprep.subr.mxu0 %v554
    %946 = vmatpush1.msra.mxu0 %v553
    %947 = vmatprep.subr.mxu0 %v558
    %948 = vmatpush1.msra.mxu0 %v557
    %949 = vmatprep.subr.mxu0 %v562
    %950 = vmatpush1.msra.mxu0 %v561
    %951 = vmatprep.subr.mxu0 %v566
    %952 = vmatpush1.msra.mxu0 %v565
    %953 = vmatprep.subr.mxu0 %v570
    %954 = vmatpush1.msra.mxu0 %v569
    %955 = vmatprep.subr.mxu0 %v574
    %956 = vmatpush1.msra.mxu0 %v573
    %957 = vmatprep.subr.mxu0 %v578
    %958 = vmatpush1.msra.mxu0 %v577
    %959 = vmatprep.subr.mxu0 %v582
    %960 = vmatpush1.msra.mxu0 %v581
    %961 = vmatprep.subr.mxu0 %v586
    %962 = vmatpush1.msra.mxu0 %v585
    %963 = vmatprep.subr.mxu0 %v590
    %964 = vmatpush1.msra.mxu0 %v589
    %965 = vmatprep.subr.mxu0 0.0
    %966 = vmatpush1.msra.mxu0 0.0
    %967 = vmatprep.subr.mxu0 0.0
    %968 = vmatpush1.msra.mxu0 0.0
    %969 = vmatprep.subr.mxu0 0.0
    %970 = vmatpush1.msra.mxu0 0.0
    %971 = vmatprep.subr.mxu0 0.0
    %972 = vmatpush1.msra.mxu0 0.0
    %973 = vmatprep.subr.mxu0 0.0
    %974 = vmatpush1.msra.mxu0 0.0
    %975 = vmatprep.subr.mxu0 0.0
    %976 = vmatpush1.msra.mxu0 0.0
    %977 = vmatprep.subr.mxu0 0.0
    %978 = vmatpush1.msra.mxu0 0.0
    %979 = vmatprep.subr.mxu0 0.0
    %980 = vmatpush1.msra.mxu0 0.0
    %981 = vmatprep.subr.mxu0 0.0
    %982 = vmatpush1.msra.mxu0 0.0
    %983 = vmatprep.subr.mxu0 0.0
    %984 = vmatpush1.msra.mxu0 0.0
    %985 = vmatprep.subr.mxu0 0.0
    %986 = vmatpush1.msra.mxu0 0.0
    %987 = vmatprep.subr.mxu0 0.0
    %988 = vmatpush1.msra.mxu0 0.0
    %989 = vmatprep.subr.mxu0 0.0
    %990 = vmatpush1.msra.mxu0 0.0
    %991 = vmatprep.subr.mxu0 0.0
    %992 = vmatpush1.msra.mxu0 0.0
    %993 = vmatprep.subr.mxu0 0.0
    %994 = vmatpush1.msra.mxu0 0.0
    %995 = vmatprep.subr.mxu0 0.0
    %996 = vmatpush1.msra.mxu0 0.0
    %997 = vmatprep.mubr.f32.mxu0 0.0
    %998 = vmatmul.mubr.f32.gmra.mrb[0].mxu0 %v932
    %v999 = vpop.f32.mrb[0].mxu0
    %v1000 = vadd.f32 0.0, %v999
    %v1001 = vpop.f32.mrb[0].mxu0
    %v1002 = vadd.f32 0.0, %v1001
    %1003 = vdwg.mxu0
    %1004 = vmatprep.subr.mxu0 %v532
    %1005 = vmatpush1.msra.mxu0 %v531
    %1006 = vmatprep.subr.mxu0 %v536
    %1007 = vmatpush1.msra.mxu0 %v535
    %1008 = vmatprep.subr.mxu0 %v540
    %1009 = vmatpush1.msra.mxu0 %v539
    %1010 = vmatprep.subr.mxu0 %v544
    %1011 = vmatpush1.msra.mxu0 %v543
    %1012 = vmatprep.subr.mxu0 %v548
    %1013 = vmatpush1.msra.mxu0 %v547
    %1014 = vmatprep.subr.mxu0 %v552
    %1015 = vmatpush1.msra.mxu0 %v551
    %1016 = vmatprep.subr.mxu0 %v556
    %1017 = vmatpush1.msra.mxu0 %v555
    %1018 = vmatprep.subr.mxu0 %v560
    %1019 = vmatpush1.msra.mxu0 %v559
    %1020 = vmatprep.subr.mxu0 %v564
    %1021 = vmatpush1.msra.mxu0 %v563
    %1022 = vmatprep.subr.mxu0 %v568
    %1023 = vmatpush1.msra.mxu0 %v567
    %1024 = vmatprep.subr.mxu0 %v572
    %1025 = vmatpush1.msra.mxu0 %v571
    %1026 = vmatprep.subr.mxu0 %v576
    %1027 = vmatpush1.msra.mxu0 %v575
    %1028 = vmatprep.subr.mxu0 %v580
    %1029 = vmatpush1.msra.mxu0 %v579
    %1030 = vmatprep.subr.mxu0 %v584
    %1031 = vmatpush1.msra.mxu0 %v583
    %1032 = vmatprep.subr.mxu0 %v588
    %1033 = vmatpush1.msra.mxu0 %v587
    %1034 = vmatprep.subr.mxu0 %v592
    %1035 = vmatpush1.msra.mxu0 %v591
    %1036 = vmatprep.subr.mxu0 0.0
    %1037 = vmatpush1.msra.mxu0 0.0
    %1038 = vmatprep.subr.mxu0 0.0
    %1039 = vmatpush1.msra.mxu0 0.0
    %1040 = vmatprep.subr.mxu0 0.0
    %1041 = vmatpush1.msra.mxu0 0.0
    %1042 = vmatprep.subr.mxu0 0.0
    %1043 = vmatpush1.msra.mxu0 0.0
    %1044 = vmatprep.subr.mxu0 0.0
    %1045 = vmatpush1.msra.mxu0 0.0
    %1046 = vmatprep.subr.mxu0 0.0
    %1047 = vmatpush1.msra.mxu0 0.0
    %1048 = vmatprep.subr.mxu0 0.0
    %1049 = vmatpush1.msra.mxu0 0.0
    %1050 = vmatprep.subr.mxu0 0.0
    %1051 = vmatpush1.msra.mxu0 0.0
    %1052 = vmatprep.subr.mxu0 0.0
    %1053 = vmatpush1.msra.mxu0 0.0
    %1054 = vmatprep.subr.mxu0 0.0
    %1055 = vmatpush1.msra.mxu0 0.0
    %1056 = vmatprep.subr.mxu0 0.0
    %1057 = vmatpush1.msra.mxu0 0.0
    %1058 = vmatprep.subr.mxu0 0.0
    %1059 = vmatpush1.msra.mxu0 0.0
    %1060 = vmatprep.subr.mxu0 0.0
    %1061 = vmatpush1.msra.mxu0 0.0
    %1062 = vmatprep.subr.mxu0 0.0
    %1063 = vmatpush1.msra.mxu0 0.0
    %1064 = vmatprep.subr.mxu0 0.0
    %1065 = vmatpush1.msra.mxu0 0.0
    %1066 = vmatprep.subr.mxu0 0.0
    %1067 = vmatpush1.msra.mxu0 0.0
    %1068 = vmatprep.mubr.f32.mxu0 0.0
    %1069 = vmatmul.mubr.f32.gmra.mrb[0].mxu0 %v932
    %v1070 = vpop.f32.mrb[0].mxu0
    %v1071 = vadd.f32 0.0, %v1070
    %v1072 = vpop.f32.mrb[0].mxu0
    %v1073 = vadd.f32 0.0, %v1072
    %1074 = vdwg.mxu0
    %v1075 = vadd.f32 %v382, %v1000
    %v1076 = vadd.f32 %v384, %v1002
    %v1077 = vadd.f32 %v495, %v1071
    %v1078 = vadd.f32 %v497, %v1073
    %v1079 = vxor.u32 %v1075, 2147483648
    %v1080 = vmul.f32 %v1079, 1.442695
    %v1081 = vpow.pop %v1080
    %v1082 = vadd.f32 %v1081, 1.0
    %v1083 = vrcp.pop %v1082
    %v1084 = vmul.f32 1.0, %v1083
    %v1085 = vxor.u32 %v1076, 2147483648
    %v1086 = vmul.f32 %v1085, 1.442695
    %v1087 = vpow.pop %v1086
    %v1088 = vadd.f32 %v1087, 1.0
    %v1089 = vrcp.pop %v1088
    %v1090 = vmul.f32 1.0, %v1089
    %v1091 = vtanh.pop %v1077
    %v1092 = vxor.u32 %v1078, 2147483648
    %v1093 = vmul.f32 %v1092, 1.442695
    %v1094 = vpow.pop %v1093
    %v1095 = vadd.f32 %v1094, 1.0
    %v1096 = vrcp.pop %v1095
    %v1097 = vmul.f32 1.0, %v1096
    %v1098 = vmul.f32 %v1090, %v930
    %v1099 = vmul.f32 %v1084, %v1091
    %v1100 = vadd.f32 %v1098, %v1099
    %v1101 = vtanh.pop %v1100
    %v1102 = vmul.f32 %v1097, %v1101
    %1103 = vmatprep.subr.mxu0 %v530
    %1104 = vmatpush1.msra.mxu0 %v529
    %1105 = vmatprep.subr.mxu0 %v534
    %1106 = vmatpush1.msra.mxu0 %v533
    %1107 = vmatprep.subr.mxu0 %v538
    %1108 = vmatpush1.msra.mxu0 %v537
    %1109 = vmatprep.subr.mxu0 %v542
    %1110 = vmatpush1.msra.mxu0 %v541
    %1111 = vmatprep.subr.mxu0 %v546
    %1112 = vmatpush1.msra.mxu0 %v545
    %1113 = vmatprep.subr.mxu0 %v550
    %1114 = vmatpush1.msra.mxu0 %v549
    %1115 = vmatprep.subr.mxu0 %v554
    %1116 = vmatpush1.msra.mxu0 %v553
    %1117 = vmatprep.subr.mxu0 %v558
    %1118 = vmatpush1.msra.mxu0 %v557
    %1119 = vmatprep.subr.mxu0 %v562
    %1120 = vmatpush1.msra.mxu0 %v561
    %1121 = vmatprep.subr.mxu0 %v566
    %1122 = vmatpush1.msra.mxu0 %v565
    %1123 = vmatprep.subr.mxu0 %v570
    %1124 = vmatpush1.msra.mxu0 %v569
    %1125 = vmatprep.subr.mxu0 %v574
    %1126 = vmatpush1.msra.mxu0 %v573
    %1127 = vmatprep.subr.mxu0 %v578
    %1128 = vmatpush1.msra.mxu0 %v577
    %1129 = vmatprep.subr.mxu0 %v582
    %1130 = vmatpush1.msra.mxu0 %v581
    %1131 = vmatprep.subr.mxu0 %v586
    %1132 = vmatpush1.msra.mxu0 %v585
    %1133 = vmatprep.subr.mxu0 %v590
    %1134 = vmatpush1.msra.mxu0 %v589
    %1135 = vmatprep.subr.mxu0 0.0
    %1136 = vmatpush1.msra.mxu0 0.0
    %1137 = vmatprep.subr.mxu0 0.0
    %1138 = vmatpush1.msra.mxu0 0.0
    %1139 = vmatprep.subr.mxu0 0.0
    %1140 = vmatpush1.msra.mxu0 0.0
    %1141 = vmatprep.subr.mxu0 0.0
    %1142 = vmatpush1.msra.mxu0 0.0
    %1143 = vmatprep.subr.mxu0 0.0
    %1144 = vmatpush1.msra.mxu0 0.0
    %1145 = vmatprep.subr.mxu0 0.0
    %1146 = vmatpush1.msra.mxu0 0.0
    %1147 = vmatprep.subr.mxu0 0.0
    %1148 = vmatpush1.msra.mxu0 0.0
    %1149 = vmatprep.subr.mxu0 0.0
    %1150 = vmatpush1.msra.mxu0 0.0
    %1151 = vmatprep.subr.mxu0 0.0
    %1152 = vmatpush1.msra.mxu0 0.0
    %1153 = vmatprep.subr.mxu0 0.0
    %1154 = vmatpush1.msra.mxu0 0.0
    %1155 = vmatprep.subr.mxu0 0.0
    %1156 = vmatpush1.msra.mxu0 0.0
    %1157 = vmatprep.subr.mxu0 0.0
    %1158 = vmatpush1.msra.mxu0 0.0
    %1159 = vmatprep.subr.mxu0 0.0
    %1160 = vmatpush1.msra.mxu0 0.0
    %1161 = vmatprep.subr.mxu0 0.0
    %1162 = vmatpush1.msra.mxu0 0.0
    %1163 = vmatprep.subr.mxu0 0.0
    %1164 = vmatpush1.msra.mxu0 0.0
    %1165 = vmatprep.subr.mxu0 0.0
    %1166 = vmatpush1.msra.mxu0 0.0
    %1167 = vmatprep.mubr.f32.mxu0 0.0
    %1168 = vmatmul.mubr.f32.gmra.mrb[0].mxu0 %v1102
    %v1169 = vpop.f32.mrb[0].mxu0
    %v1170 = vadd.f32 0.0, %v1169
    %v1171 = vpop.f32.mrb[0].mxu0
    %v1172 = vadd.f32 0.0, %v1171
    %1173 = vdwg.mxu0
    %1174 = vmatprep.subr.mxu0 %v532
    %1175 = vmatpush1.msra.mxu0 %v531
    %1176 = vmatprep.subr.mxu0 %v536
    %1177 = vmatpush1.msra.mxu0 %v535
    %1178 = vmatprep.subr.mxu0 %v540
    %1179 = vmatpush1.msra.mxu0 %v539
    %1180 = vmatprep.subr.mxu0 %v544
    %1181 = vmatpush1.msra.mxu0 %v543
    %1182 = vmatprep.subr.mxu0 %v548
    %1183 = vmatpush1.msra.mxu0 %v547
    %1184 = vmatprep.subr.mxu0 %v552
    %1185 = vmatpush1.msra.mxu0 %v551
    %1186 = vmatprep.subr.mxu0 %v556
    %1187 = vmatpush1.msra.mxu0 %v555
    %1188 = vmatprep.subr.mxu0 %v560
    %1189 = vmatpush1.msra.mxu0 %v559
    %1190 = vmatprep.subr.mxu0 %v564
    %1191 = vmatpush1.msra.mxu0 %v563
    %1192 = vmatprep.subr.mxu0 %v568
    %1193 = vmatpush1.msra.mxu0 %v567
    %1194 = vmatprep.subr.mxu0 %v572
    %1195 = vmatpush1.msra.mxu0 %v571
    %1196 = vmatprep.subr.mxu0 %v576
    %1197 = vmatpush1.msra.mxu0 %v575
    %1198 = vmatprep.subr.mxu0 %v580
    %1199 = vmatpush1.msra.mxu0 %v579
    %1200 = vmatprep.subr.mxu0 %v584
    %1201 = vmatpush1.msra.mxu0 %v583
    %1202 = vmatprep.subr.mxu0 %v588
    %1203 = vmatpush1.msra.mxu0 %v587
    %1204 = vmatprep.subr.mxu0 %v592
    %1205 = vmatpush1.msra.mxu0 %v591
    %1206 = vmatprep.subr.mxu0 0.0
    %1207 = vmatpush1.msra.mxu0 0.0
    %1208 = vmatprep.subr.mxu0 0.0
    %1209 = vmatpush1.msra.mxu0 0.0
    %1210 = vmatprep.subr.mxu0 0.0
    %1211 = vmatpush1.msra.mxu0 0.0
    %1212 = vmatprep.subr.mxu0 0.0
    %1213 = vmatpush1.msra.mxu0 0.0
    %1214 = vmatprep.subr.mxu0 0.0
    %1215 = vmatpush1.msra.mxu0 0.0
    %1216 = vmatprep.subr.mxu0 0.0
    %1217 = vmatpush1.msra.mxu0 0.0
    %1218 = vmatprep.subr.mxu0 0.0
    %1219 = vmatpush1.msra.mxu0 0.0
    %1220 = vmatprep.subr.mxu0 0.0
    %1221 = vmatpush1.msra.mxu0 0.0
    %1222 = vmatprep.subr.mxu0 0.0
    %1223 = vmatpush1.msra.mxu0 0.0
    %1224 = vmatprep.subr.mxu0 0.0
    %1225 = vmatpush1.msra.mxu0 0.0
    %1226 = vmatprep.subr.mxu0 0.0
    %1227 = vmatpush1.msra.mxu0 0.0
    %1228 = vmatprep.subr.mxu0 0.0
    %1229 = vmatpush1.msra.mxu0 0.0
    %1230 = vmatprep.subr.mxu0 0.0
    %1231 = vmatpush1.msra.mxu0 0.0
    %1232 = vmatprep.subr.mxu0 0.0
    %1233 = vmatpush1.msra.mxu0 0.0
    %1234 = vmatprep.subr.mxu0 0.0
    %1235 = vmatpush1.msra.mxu0 0.0
    %1236 = vmatprep.subr.mxu0 0.0
    %1237 = vmatpush1.msra.mxu0 0.0
    %1238 = vmatprep.mubr.f32.mxu0 0.0
    %1239 = vmatmul.mubr.f32.gmra.mrb[0].mxu0 %v1102
    %v1240 = vpop.f32.mrb[0].mxu0
    %v1241 = vadd.f32 0.0, %v1240
    %v1242 = vpop.f32.mrb[0].mxu0
    %v1243 = vadd.f32 0.0, %v1242
    %1244 = vdwg.mxu0
    %v1245 = vadd.f32 %v388, %v1170
    %v1246 = vadd.f32 %v390, %v1172
    %v1247 = vadd.f32 %v501, %v1241
    %v1248 = vadd.f32 %v503, %v1243
    %v1249 = vxor.u32 %v1245, 2147483648
    %v1250 = vmul.f32 %v1249, 1.442695
    %v1251 = vpow.pop %v1250
    %v1252 = vadd.f32 %v1251, 1.0
    %v1253 = vrcp.pop %v1252
    %v1254 = vmul.f32 1.0, %v1253
    %v1255 = vxor.u32 %v1246, 2147483648
    %v1256 = vmul.f32 %v1255, 1.442695
    %v1257 = vpow.pop %v1256
    %v1258 = vadd.f32 %v1257, 1.0
    %v1259 = vrcp.pop %v1258
    %v1260 = vmul.f32 1.0, %v1259
    %v1261 = vtanh.pop %v1247
    %v1262 = vxor.u32 %v1248, 2147483648
    %v1263 = vmul.f32 %v1262, 1.442695
    %v1264 = vpow.pop %v1263
    %v1265 = vadd.f32 %v1264, 1.0
    %v1266 = vrcp.pop %v1265
    %v1267 = vmul.f32 1.0, %v1266
    %v1268 = vmul.f32 %v1260, %v1100
    %v1269 = vmul.f32 %v1254, %v1261
    %v1270 = vadd.f32 %v1268, %v1269
    %v1271 = vtanh.pop %v1270
    %v1272 = vmul.f32 %v1267, %v1271
    %1273 = vmatprep.subr.mxu0 %v530
    %1274 = vmatpush1.msra.mxu0 %v529
    %1275 = vmatprep.subr.mxu0 %v534
    %1276 = vmatpush1.msra.mxu0 %v533
    %1277 = vmatprep.subr.mxu0 %v538
    %1278 = vmatpush1.msra.mxu0 %v537
    %1279 = vmatprep.subr.mxu0 %v542
    %1280 = vmatpush1.msra.mxu0 %v541
    %1281 = vmatprep.subr.mxu0 %v546
    %1282 = vmatpush1.msra.mxu0 %v545
    %1283 = vmatprep.subr.mxu0 %v550
    %1284 = vmatpush1.msra.mxu0 %v549
    %1285 = vmatprep.subr.mxu0 %v554
    %1286 = vmatpush1.msra.mxu0 %v553
    %1287 = vmatprep.subr.mxu0 %v558
    %1288 = vmatpush1.msra.mxu0 %v557
    %1289 = vmatprep.subr.mxu0 %v562
    %1290 = vmatpush1.msra.mxu0 %v561
    %1291 = vmatprep.subr.mxu0 %v566
    %1292 = vmatpush1.msra.mxu0 %v565
    %1293 = vmatprep.subr.mxu0 %v570
    %1294 = vmatpush1.msra.mxu0 %v569
    %1295 = vmatprep.subr.mxu0 %v574
    %1296 = vmatpush1.msra.mxu0 %v573
    %1297 = vmatprep.subr.mxu0 %v578
    %1298 = vmatpush1.msra.mxu0 %v577
    %1299 = vmatprep.subr.mxu0 %v582
    %1300 = vmatpush1.msra.mxu0 %v581
    %1301 = vmatprep.subr.mxu0 %v586
    %1302 = vmatpush1.msra.mxu0 %v585
    %1303 = vmatprep.subr.mxu0 %v590
    %1304 = vmatpush1.msra.mxu0 %v589
    %1305 = vmatprep.subr.mxu0 0.0
    %1306 = vmatpush1.msra.mxu0 0.0
    %1307 = vmatprep.subr.mxu0 0.0
    %1308 = vmatpush1.msra.mxu0 0.0
    %1309 = vmatprep.subr.mxu0 0.0
    %1310 = vmatpush1.msra.mxu0 0.0
    %1311 = vmatprep.subr.mxu0 0.0
    %1312 = vmatpush1.msra.mxu0 0.0
    %1313 = vmatprep.subr.mxu0 0.0
    %1314 = vmatpush1.msra.mxu0 0.0
    %1315 = vmatprep.subr.mxu0 0.0
    %1316 = vmatpush1.msra.mxu0 0.0
    %1317 = vmatprep.subr.mxu0 0.0
    %1318 = vmatpush1.msra.mxu0 0.0
    %1319 = vmatprep.subr.mxu0 0.0
    %1320 = vmatpush1.msra.mxu0 0.0
    %1321 = vmatprep.subr.mxu0 0.0
    %1322 = vmatpush1.msra.mxu0 0.0
    %1323 = vmatprep.subr.mxu0 0.0
    %1324 = vmatpush1.msra.mxu0 0.0
    %1325 = vmatprep.subr.mxu0 0.0
    %1326 = vmatpush1.msra.mxu0 0.0
    %1327 = vmatprep.subr.mxu0 0.0
    %1328 = vmatpush1.msra.mxu0 0.0
    %1329 = vmatprep.subr.mxu0 0.0
    %1330 = vmatpush1.msra.mxu0 0.0
    %1331 = vmatprep.subr.mxu0 0.0
    %1332 = vmatpush1.msra.mxu0 0.0
    %1333 = vmatprep.subr.mxu0 0.0
    %1334 = vmatpush1.msra.mxu0 0.0
    %1335 = vmatprep.subr.mxu0 0.0
    %1336 = vmatpush1.msra.mxu0 0.0
    %1337 = vmatprep.mubr.f32.mxu0 0.0
    %1338 = vmatmul.mubr.f32.gmra.mrb[0].mxu0 %v1272
    %v1339 = vpop.f32.mrb[0].mxu0
    %v1340 = vadd.f32 0.0, %v1339
    %v1341 = vpop.f32.mrb[0].mxu0
    %v1342 = vadd.f32 0.0, %v1341
    %1343 = vdwg.mxu0
    %1344 = vmatprep.subr.mxu0 %v532
    %1345 = vmatpush1.msra.mxu0 %v531
    %1346 = vmatprep.subr.mxu0 %v536
    %1347 = vmatpush1.msra.mxu0 %v535
    %1348 = vmatprep.subr.mxu0 %v540
    %1349 = vmatpush1.msra.mxu0 %v539
    %1350 = vmatprep.subr.mxu0 %v544
    %1351 = vmatpush1.msra.mxu0 %v543
    %1352 = vmatprep.subr.mxu0 %v548
    %1353 = vmatpush1.msra.mxu0 %v547
    %1354 = vmatprep.subr.mxu0 %v552
    %1355 = vmatpush1.msra.mxu0 %v551
    %1356 = vmatprep.subr.mxu0 %v556
    %1357 = vmatpush1.msra.mxu0 %v555
    %1358 = vmatprep.subr.mxu0 %v560
    %1359 = vmatpush1.msra.mxu0 %v559
    %1360 = vmatprep.subr.mxu0 %v564
    %1361 = vmatpush1.msra.mxu0 %v563
    %1362 = vmatprep.subr.mxu0 %v568
    %1363 = vmatpush1.msra.mxu0 %v567
    %1364 = vmatprep.subr.mxu0 %v572
    %1365 = vmatpush1.msra.mxu0 %v571
    %1366 = vmatprep.subr.mxu0 %v576
    %1367 = vmatpush1.msra.mxu0 %v575
    %1368 = vmatprep.subr.mxu0 %v580
    %1369 = vmatpush1.msra.mxu0 %v579
    %1370 = vmatprep.subr.mxu0 %v584
    %1371 = vmatpush1.msra.mxu0 %v583
    %1372 = vmatprep.subr.mxu0 %v588
    %1373 = vmatpush1.msra.mxu0 %v587
    %1374 = vmatprep.subr.mxu0 %v592
    %1375 = vmatpush1.msra.mxu0 %v591
    %1376 = vmatprep.subr.mxu0 0.0
    %1377 = vmatpush1.msra.mxu0 0.0
    %1378 = vmatprep.subr.mxu0 0.0
    %1379 = vmatpush1.msra.mxu0 0.0
    %1380 = vmatprep.subr.mxu0 0.0
    %1381 = vmatpush1.msra.mxu0 0.0
    %1382 = vmatprep.subr.mxu0 0.0
    %1383 = vmatpush1.msra.mxu0 0.0
    %1384 = vmatprep.subr.mxu0 0.0
    %1385 = vmatpush1.msra.mxu0 0.0
    %1386 = vmatprep.subr.mxu0 0.0
    %1387 = vmatpush1.msra.mxu0 0.0
    %1388 = vmatprep.subr.mxu0 0.0
    %1389 = vmatpush1.msra.mxu0 0.0
    %1390 = vmatprep.subr.mxu0 0.0
    %1391 = vmatpush1.msra.mxu0 0.0
    %1392 = vmatprep.subr.mxu0 0.0
    %1393 = vmatpush1.msra.mxu0 0.0
    %1394 = vmatprep.subr.mxu0 0.0
    %1395 = vmatpush1.msra.mxu0 0.0
    %1396 = vmatprep.subr.mxu0 0.0
    %1397 = vmatpush1.msra.mxu0 0.0
    %1398 = vmatprep.subr.mxu0 0.0
    %1399 = vmatpush1.msra.mxu0 0.0
    %1400 = vmatprep.subr.mxu0 0.0
    %1401 = vmatpush1.msra.mxu0 0.0
    %1402 = vmatprep.subr.mxu0 0.0
    %1403 = vmatpush1.msra.mxu0 0.0
    %1404 = vmatprep.subr.mxu0 0.0
    %1405 = vmatpush1.msra.mxu0 0.0
    %1406 = vmatprep.subr.mxu0 0.0
    %1407 = vmatpush1.msra.mxu0 0.0
    %1408 = vmatprep.mubr.f32.mxu0 0.0
    %1409 = vmatmul.mubr.f32.gmra.mrb[0].mxu0 %v1272
    %v1410 = vpop.f32.mrb[0].mxu0
    %v1411 = vadd.f32 0.0, %v1410
    %v1412 = vpop.f32.mrb[0].mxu0
    %v1413 = vadd.f32 0.0, %v1412
    %1414 = vdwg.mxu0
    %v1415 = vadd.f32 %v394, %v1340
    %v1416 = vadd.f32 %v396, %v1342
    %v1417 = vadd.f32 %v507, %v1411
    %v1418 = vadd.f32 %v509, %v1413
    %v1419 = vxor.u32 %v1415, 2147483648
    %v1420 = vmul.f32 %v1419, 1.442695
    %v1421 = vpow.pop %v1420
    %v1422 = vadd.f32 %v1421, 1.0
    %v1423 = vrcp.pop %v1422
    %v1424 = vmul.f32 1.0, %v1423
    %v1425 = vxor.u32 %v1416, 2147483648
    %v1426 = vmul.f32 %v1425, 1.442695
    %v1427 = vpow.pop %v1426
    %v1428 = vadd.f32 %v1427, 1.0
    %v1429 = vrcp.pop %v1428
    %v1430 = vmul.f32 1.0, %v1429
    %v1431 = vtanh.pop %v1417
    %v1432 = vxor.u32 %v1418, 2147483648
    %v1433 = vmul.f32 %v1432, 1.442695
    %v1434 = vpow.pop %v1433
    %v1435 = vadd.f32 %v1434, 1.0
    %v1436 = vrcp.pop %v1435
    %v1437 = vmul.f32 1.0, %v1436
    %v1438 = vmul.f32 %v1430, %v1270
    %v1439 = vmul.f32 %v1424, %v1431
    %v1440 = vadd.f32 %v1438, %v1439
    %v1441 = vtanh.pop %v1440
    %v1442 = vmul.f32 %v1437, %v1441
    %1443 = vmatprep.subr.mxu0 %v530
    %1444 = vmatpush1.msra.mxu0 %v529
    %1445 = vmatprep.subr.mxu0 %v534
    %1446 = vmatpush1.msra.mxu0 %v533
    %1447 = vmatprep.subr.mxu0 %v538
    %1448 = vmatpush1.msra.mxu0 %v537
    %1449 = vmatprep.subr.mxu0 %v542
    %1450 = vmatpush1.msra.mxu0 %v541
    %1451 = vmatprep.subr.mxu0 %v546
    %1452 = vmatpush1.msra.mxu0 %v545
    %1453 = vmatprep.subr.mxu0 %v550
    %1454 = vmatpush1.msra.mxu0 %v549
    %1455 = vmatprep.subr.mxu0 %v554
    %1456 = vmatpush1.msra.mxu0 %v553
    %1457 = vmatprep.subr.mxu0 %v558
    %1458 = vmatpush1.msra.mxu0 %v557
    %1459 = vmatprep.subr.mxu0 %v562
    %1460 = vmatpush1.msra.mxu0 %v561
    %1461 = vmatprep.subr.mxu0 %v566
    %1462 = vmatpush1.msra.mxu0 %v565
    %1463 = vmatprep.subr.mxu0 %v570
    %1464 = vmatpush1.msra.mxu0 %v569
    %1465 = vmatprep.subr.mxu0 %v574
    %1466 = vmatpush1.msra.mxu0 %v573
    %1467 = vmatprep.subr.mxu0 %v578
    %1468 = vmatpush1.msra.mxu0 %v577
    %1469 = vmatprep.subr.mxu0 %v582
    %1470 = vmatpush1.msra.mxu0 %v581
    %1471 = vmatprep.subr.mxu0 %v586
    %1472 = vmatpush1.msra.mxu0 %v585
    %1473 = vmatprep.subr.mxu0 %v590
    %1474 = vmatpush1.msra.mxu0 %v589
    %1475 = vmatprep.subr.mxu0 0.0
    %1476 = vmatpush1.msra.mxu0 0.0
    %1477 = vmatprep.subr.mxu0 0.0
    %1478 = vmatpush1.msra.mxu0 0.0
    %1479 = vmatprep.subr.mxu0 0.0
    %1480 = vmatpush1.msra.mxu0 0.0
    %1481 = vmatprep.subr.mxu0 0.0
    %1482 = vmatpush1.msra.mxu0 0.0
    %1483 = vmatprep.subr.mxu0 0.0
    %1484 = vmatpush1.msra.mxu0 0.0
    %1485 = vmatprep.subr.mxu0 0.0
    %1486 = vmatpush1.msra.mxu0 0.0
    %1487 = vmatprep.subr.mxu0 0.0
    %1488 = vmatpush1.msra.mxu0 0.0
    %1489 = vmatprep.subr.mxu0 0.0
    %1490 = vmatpush1.msra.mxu0 0.0
    %1491 = vmatprep.subr.mxu0 0.0
    %1492 = vmatpush1.msra.mxu0 0.0
    %1493 = vmatprep.subr.mxu0 0.0
    %1494 = vmatpush1.msra.mxu0 0.0
    %1495 = vmatprep.subr.mxu0 0.0
    %1496 = vmatpush1.msra.mxu0 0.0
    %1497 = vmatprep.subr.mxu0 0.0
    %1498 = vmatpush1.msra.mxu0 0.0
    %1499 = vmatprep.subr.mxu0 0.0
    %1500 = vmatpush1.msra.mxu0 0.0
    %1501 = vmatprep.subr.mxu0 0.0
    %1502 = vmatpush1.msra.mxu0 0.0
    %1503 = vmatprep.subr.mxu0 0.0
    %1504 = vmatpush1.msra.mxu0 0.0
    %1505 = vmatprep.subr.mxu0 0.0
    %1506 = vmatpush1.msra.mxu0 0.0
    %1507 = vmatprep.mubr.f32.mxu0 0.0
    %1508 = vmatmul.mubr.f32.gmra.mrb[0].mxu0 %v1442
    %v1509 = vpop.f32.mrb[0].mxu0
    %v1510 = vadd.f32 0.0, %v1509
    %v1511 = vpop.f32.mrb[0].mxu0
    %v1512 = vadd.f32 0.0, %v1511
    %1513 = vdwg.mxu0
    %1514 = vmatprep.subr.mxu0 %v532
    %1515 = vmatpush1.msra.mxu0 %v531
    %1516 = vmatprep.subr.mxu0 %v536
    %1517 = vmatpush1.msra.mxu0 %v535
    %1518 = vmatprep.subr.mxu0 %v540
    %1519 = vmatpush1.msra.mxu0 %v539
    %1520 = vmatprep.subr.mxu0 %v544
    %1521 = vmatpush1.msra.mxu0 %v543
    %1522 = vmatprep.subr.mxu0 %v548
    %1523 = vmatpush1.msra.mxu0 %v547
    %1524 = vmatprep.subr.mxu0 %v552
    %1525 = vmatpush1.msra.mxu0 %v551
    %1526 = vmatprep.subr.mxu0 %v556
    %1527 = vmatpush1.msra.mxu0 %v555
    %1528 = vmatprep.subr.mxu0 %v560
    %1529 = vmatpush1.msra.mxu0 %v559
    %1530 = vmatprep.subr.mxu0 %v564
    %1531 = vmatpush1.msra.mxu0 %v563
    %1532 = vmatprep.subr.mxu0 %v568
    %1533 = vmatpush1.msra.mxu0 %v567
    %1534 = vmatprep.subr.mxu0 %v572
    %1535 = vmatpush1.msra.mxu0 %v571
    %1536 = vmatprep.subr.mxu0 %v576
    %1537 = vmatpush1.msra.mxu0 %v575
    %1538 = vmatprep.subr.mxu0 %v580
    %1539 = vmatpush1.msra.mxu0 %v579
    %1540 = vmatprep.subr.mxu0 %v584
    %1541 = vmatpush1.msra.mxu0 %v583
    %1542 = vmatprep.subr.mxu0 %v588
    %1543 = vmatpush1.msra.mxu0 %v587
    %1544 = vmatprep.subr.mxu0 %v592
    %1545 = vmatpush1.msra.mxu0 %v591
    %1546 = vmatprep.subr.mxu0 0.0
    %1547 = vmatpush1.msra.mxu0 0.0
    %1548 = vmatprep.subr.mxu0 0.0
    %1549 = vmatpush1.msra.mxu0 0.0
    %1550 = vmatprep.subr.mxu0 0.0
    %1551 = vmatpush1.msra.mxu0 0.0
    %1552 = vmatprep.subr.mxu0 0.0
    %1553 = vmatpush1.msra.mxu0 0.0
    %1554 = vmatprep.subr.mxu0 0.0
    %1555 = vmatpush1.msra.mxu0 0.0
    %1556 = vmatprep.subr.mxu0 0.0
    %1557 = vmatpush1.msra.mxu0 0.0
    %1558 = vmatprep.subr.mxu0 0.0
    %1559 = vmatpush1.msra.mxu0 0.0
    %1560 = vmatprep.subr.mxu0 0.0
    %1561 = vmatpush1.msra.mxu0 0.0
    %1562 = vmatprep.subr.mxu0 0.0
    %1563 = vmatpush1.msra.mxu0 0.0
    %1564 = vmatprep.subr.mxu0 0.0
    %1565 = vmatpush1.msra.mxu0 0.0
    %1566 = vmatprep.subr.mxu0 0.0
    %1567 = vmatpush1.msra.mxu0 0.0
    %1568 = vmatprep.subr.mxu0 0.0
    %1569 = vmatpush1.msra.mxu0 0.0
    %1570 = vmatprep.subr.mxu0 0.0
    %1571 = vmatpush1.msra.mxu0 0.0
    %1572 = vmatprep.subr.mxu0 0.0
    %1573 = vmatpush1.msra.mxu0 0.0
    %1574 = vmatprep.subr.mxu0 0.0
    %1575 = vmatpush1.msra.mxu0 0.0
    %1576 = vmatprep.subr.mxu0 0.0
    %1577 = vmatpush1.msra.mxu0 0.0
    %1578 = vmatprep.mubr.f32.mxu0 0.0
    %1579 = vmatmul.mubr.f32.gmra.mrb[0].mxu0 %v1442
    %v1580 = vpop.f32.mrb[0].mxu0
    %v1581 = vadd.f32 0.0, %v1580
    %v1582 = vpop.f32.mrb[0].mxu0
    %v1583 = vadd.f32 0.0, %v1582
    %1584 = vdwg.mxu0
    %v1585 = vadd.f32 %v400, %v1510
    %v1586 = vadd.f32 %v402, %v1512
    %v1587 = vadd.f32 %v513, %v1581
    %v1588 = vadd.f32 %v515, %v1583
    %v1589 = vxor.u32 %v1585, 2147483648
    %v1590 = vmul.f32 %v1589, 1.442695
    %v1591 = vpow.pop %v1590
    %v1592 = vadd.f32 %v1591, 1.0
    %v1593 = vrcp.pop %v1592
    %v1594 = vmul.f32 1.0, %v1593
    %v1595 = vxor.u32 %v1586, 2147483648
    %v1596 = vmul.f32 %v1595, 1.442695
    %v1597 = vpow.pop %v1596
    %v1598 = vadd.f32 %v1597, 1.0
    %v1599 = vrcp.pop %v1598
    %v1600 = vmul.f32 1.0, %v1599
    %v1601 = vtanh.pop %v1587
    %v1602 = vxor.u32 %v1588, 2147483648
    %v1603 = vmul.f32 %v1602, 1.442695
    %v1604 = vpow.pop %v1603
    %v1605 = vadd.f32 %v1604, 1.0
    %v1606 = vrcp.pop %v1605
    %v1607 = vmul.f32 1.0, %v1606
    %v1608 = vmul.f32 %v1600, %v1440
    %v1609 = vmul.f32 %v1594, %v1601
    %v1610 = vadd.f32 %v1608, %v1609
    %v1611 = vtanh.pop %v1610
    %v1612 = vmul.f32 %v1607, %v1611
    %1613 = vmatprep.subr.mxu0 %v530
    %1614 = vmatpush1.msra.mxu0 %v529
    %1615 = vmatprep.subr.mxu0 %v534
    %1616 = vmatpush1.msra.mxu0 %v533
    %1617 = vmatprep.subr.mxu0 %v538
    %1618 = vmatpush1.msra.mxu0 %v537
    %1619 = vmatprep.subr.mxu0 %v542
    %1620 = vmatpush1.msra.mxu0 %v541
    %1621 = vmatprep.subr.mxu0 %v546
    %1622 = vmatpush1.msra.mxu0 %v545
    %1623 = vmatprep.subr.mxu0 %v550
    %1624 = vmatpush1.msra.mxu0 %v549
    %1625 = vmatprep.subr.mxu0 %v554
    %1626 = vmatpush1.msra.mxu0 %v553
    %1627 = vmatprep.subr.mxu0 %v558
    %1628 = vmatpush1.msra.mxu0 %v557
    %1629 = vmatprep.subr.mxu0 %v562
    %1630 = vmatpush1.msra.mxu0 %v561
    %1631 = vmatprep.subr.mxu0 %v566
    %1632 = vmatpush1.msra.mxu0 %v565
    %1633 = vmatprep.subr.mxu0 %v570
    %1634 = vmatpush1.msra.mxu0 %v569
    %1635 = vmatprep.subr.mxu0 %v574
    %1636 = vmatpush1.msra.mxu0 %v573
    %1637 = vmatprep.subr.mxu0 %v578
    %1638 = vmatpush1.msra.mxu0 %v577
    %1639 = vmatprep.subr.mxu0 %v582
    %1640 = vmatpush1.msra.mxu0 %v581
    %1641 = vmatprep.subr.mxu0 %v586
    %1642 = vmatpush1.msra.mxu0 %v585
    %1643 = vmatprep.subr.mxu0 %v590
    %1644 = vmatpush1.msra.mxu0 %v589
    %1645 = vmatprep.subr.mxu0 0.0
    %1646 = vmatpush1.msra.mxu0 0.0
    %1647 = vmatprep.subr.mxu0 0.0
    %1648 = vmatpush1.msra.mxu0 0.0
    %1649 = vmatprep.subr.mxu0 0.0
    %1650 = vmatpush1.msra.mxu0 0.0
    %1651 = vmatprep.subr.mxu0 0.0
    %1652 = vmatpush1.msra.mxu0 0.0
    %1653 = vmatprep.subr.mxu0 0.0
    %1654 = vmatpush1.msra.mxu0 0.0
    %1655 = vmatprep.subr.mxu0 0.0
    %1656 = vmatpush1.msra.mxu0 0.0
    %1657 = vmatprep.subr.mxu0 0.0
    %1658 = vmatpush1.msra.mxu0 0.0
    %1659 = vmatprep.subr.mxu0 0.0
    %1660 = vmatpush1.msra.mxu0 0.0
    %1661 = vmatprep.subr.mxu0 0.0
    %1662 = vmatpush1.msra.mxu0 0.0
    %1663 = vmatprep.subr.mxu0 0.0
    %1664 = vmatpush1.msra.mxu0 0.0
    %1665 = vmatprep.subr.mxu0 0.0
    %1666 = vmatpush1.msra.mxu0 0.0
    %1667 = vmatprep.subr.mxu0 0.0
    %1668 = vmatpush1.msra.mxu0 0.0
    %1669 = vmatprep.subr.mxu0 0.0
    %1670 = vmatpush1.msra.mxu0 0.0
    %1671 = vmatprep.subr.mxu0 0.0
    %1672 = vmatpush1.msra.mxu0 0.0
    %1673 = vmatprep.subr.mxu0 0.0
    %1674 = vmatpush1.msra.mxu0 0.0
    %1675 = vmatprep.subr.mxu0 0.0
    %1676 = vmatpush1.msra.mxu0 0.0
    %1677 = vmatprep.mubr.f32.mxu0 0.0
    %1678 = vmatmul.mubr.f32.gmra.mrb[0].mxu0 %v1612
    %v1679 = vpop.f32.mrb[0].mxu0
    %v1680 = vadd.f32 0.0, %v1679
    %v1681 = vpop.f32.mrb[0].mxu0
    %v1682 = vadd.f32 0.0, %v1681
    %1683 = vdwg.mxu0
    %1684 = vmatprep.subr.mxu0 %v532
    %1685 = vmatpush1.msra.mxu0 %v531
    %1686 = vmatprep.subr.mxu0 %v536
    %1687 = vmatpush1.msra.mxu0 %v535
    %1688 = vmatprep.subr.mxu0 %v540
    %1689 = vmatpush1.msra.mxu0 %v539
    %1690 = vmatprep.subr.mxu0 %v544
    %1691 = vmatpush1.msra.mxu0 %v543
    %1692 = vmatprep.subr.mxu0 %v548
    %1693 = vmatpush1.msra.mxu0 %v547
    %1694 = vmatprep.subr.mxu0 %v552
    %1695 = vmatpush1.msra.mxu0 %v551
    %1696 = vmatprep.subr.mxu0 %v556
    %1697 = vmatpush1.msra.mxu0 %v555
    %1698 = vmatprep.subr.mxu0 %v560
    %1699 = vmatpush1.msra.mxu0 %v559
    %1700 = vmatprep.subr.mxu0 %v564
    %1701 = vmatpush1.msra.mxu0 %v563
    %1702 = vmatprep.subr.mxu0 %v568
    %1703 = vmatpush1.msra.mxu0 %v567
    %1704 = vmatprep.subr.mxu0 %v572
    %1705 = vmatpush1.msra.mxu0 %v571
    %1706 = vmatprep.subr.mxu0 %v576
    %1707 = vmatpush1.msra.mxu0 %v575
    %1708 = vmatprep.subr.mxu0 %v580
    %1709 = vmatpush1.msra.mxu0 %v579
    %1710 = vmatprep.subr.mxu0 %v584
    %1711 = vmatpush1.msra.mxu0 %v583
    %1712 = vmatprep.subr.mxu0 %v588
    %1713 = vmatpush1.msra.mxu0 %v587
    %1714 = vmatprep.subr.mxu0 %v592
    %1715 = vmatpush1.msra.mxu0 %v591
    %1716 = vmatprep.subr.mxu0 0.0
    %1717 = vmatpush1.msra.mxu0 0.0
    %1718 = vmatprep.subr.mxu0 0.0
    %1719 = vmatpush1.msra.mxu0 0.0
    %1720 = vmatprep.subr.mxu0 0.0
    %1721 = vmatpush1.msra.mxu0 0.0
    %1722 = vmatprep.subr.mxu0 0.0
    %1723 = vmatpush1.msra.mxu0 0.0
    %1724 = vmatprep.subr.mxu0 0.0
    %1725 = vmatpush1.msra.mxu0 0.0
    %1726 = vmatprep.subr.mxu0 0.0
    %1727 = vmatpush1.msra.mxu0 0.0
    %1728 = vmatprep.subr.mxu0 0.0
    %1729 = vmatpush1.msra.mxu0 0.0
    %1730 = vmatprep.subr.mxu0 0.0
    %1731 = vmatpush1.msra.mxu0 0.0
    %1732 = vmatprep.subr.mxu0 0.0
    %1733 = vmatpush1.msra.mxu0 0.0
    %1734 = vmatprep.subr.mxu0 0.0
    %1735 = vmatpush1.msra.mxu0 0.0
    %1736 = vmatprep.subr.mxu0 0.0
    %1737 = vmatpush1.msra.mxu0 0.0
    %1738 = vmatprep.subr.mxu0 0.0
    %1739 = vmatpush1.msra.mxu0 0.0
    %1740 = vmatprep.subr.mxu0 0.0
    %1741 = vmatpush1.msra.mxu0 0.0
    %1742 = vmatprep.subr.mxu0 0.0
    %1743 = vmatpush1.msra.mxu0 0.0
    %1744 = vmatprep.subr.mxu0 0.0
    %1745 = vmatpush1.msra.mxu0 0.0
    %1746 = vmatprep.subr.mxu0 0.0
    %1747 = vmatpush1.msra.mxu0 0.0
    %1748 = vmatprep.mubr.f32.mxu0 0.0
    %1749 = vmatmul.mubr.f32.gmra.mrb[0].mxu0 %v1612
    %v1750 = vpop.f32.mrb[0].mxu0
    %v1751 = vadd.f32 0.0, %v1750
    %v1752 = vpop.f32.mrb[0].mxu0
    %v1753 = vadd.f32 0.0, %v1752
    %1754 = vdwg.mxu0
    %v1755 = vadd.f32 %v406, %v1680
    %v1756 = vadd.f32 %v408, %v1682
    %v1757 = vadd.f32 %v519, %v1751
    %v1758 = vadd.f32 %v521, %v1753
    %v1759 = vxor.u32 %v1755, 2147483648
    %v1760 = vmul.f32 %v1759, 1.442695
    %v1761 = vpow.pop %v1760
    %v1762 = vadd.f32 %v1761, 1.0
    %v1763 = vrcp.pop %v1762
    %v1764 = vmul.f32 1.0, %v1763
    %v1765 = vxor.u32 %v1756, 2147483648
    %v1766 = vmul.f32 %v1765, 1.442695
    %v1767 = vpow.pop %v1766
    %v1768 = vadd.f32 %v1767, 1.0
    %v1769 = vrcp.pop %v1768
    %v1770 = vmul.f32 1.0, %v1769
    %v1771 = vtanh.pop %v1757
    %v1772 = vxor.u32 %v1758, 2147483648
    %v1773 = vmul.f32 %v1772, 1.442695
    %v1774 = vpow.pop %v1773
    %v1775 = vadd.f32 %v1774, 1.0
    %v1776 = vrcp.pop %v1775
    %v1777 = vmul.f32 1.0, %v1776
    %v1778 = vmul.f32 %v1770, %v1610
    %v1779 = vmul.f32 %v1764, %v1771
    %v1780 = vadd.f32 %v1778, %v1779
    %v1781 = vtanh.pop %v1780
    %v1782 = vmul.f32 %v1777, %v1781
    %1783 = vmatprep.subr.mxu0 %v530
    %1784 = vmatpush1.msra.mxu0 %v529
    %1785 = vmatprep.subr.mxu0 %v534
    %1786 = vmatpush1.msra.mxu0 %v533
    %1787 = vmatprep.subr.mxu0 %v538
    %1788 = vmatpush1.msra.mxu0 %v537
    %1789 = vmatprep.subr.mxu0 %v542
    %1790 = vmatpush1.msra.mxu0 %v541
    %1791 = vmatprep.subr.mxu0 %v546
    %1792 = vmatpush1.msra.mxu0 %v545
    %1793 = vmatprep.subr.mxu0 %v550
    %1794 = vmatpush1.msra.mxu0 %v549
    %1795 = vmatprep.subr.mxu0 %v554
    %1796 = vmatpush1.msra.mxu0 %v553
    %1797 = vmatprep.subr.mxu0 %v558
    %1798 = vmatpush1.msra.mxu0 %v557
    %1799 = vmatprep.subr.mxu0 %v562
    %1800 = vmatpush1.msra.mxu0 %v561
    %1801 = vmatprep.subr.mxu0 %v566
    %1802 = vmatpush1.msra.mxu0 %v565
    %1803 = vmatprep.subr.mxu0 %v570
    %1804 = vmatpush1.msra.mxu0 %v569
    %1805 = vmatprep.subr.mxu0 %v574
    %1806 = vmatpush1.msra.mxu0 %v573
    %1807 = vmatprep.subr.mxu0 %v578
    %1808 = vmatpush1.msra.mxu0 %v577
    %1809 = vmatprep.subr.mxu0 %v582
    %1810 = vmatpush1.msra.mxu0 %v581
    %1811 = vmatprep.subr.mxu0 %v586
    %1812 = vmatpush1.msra.mxu0 %v585
    %1813 = vmatprep.subr.mxu0 %v590
    %1814 = vmatpush1.msra.mxu0 %v589
    %1815 = vmatprep.subr.mxu0 0.0
    %1816 = vmatpush1.msra.mxu0 0.0
    %1817 = vmatprep.subr.mxu0 0.0
    %1818 = vmatpush1.msra.mxu0 0.0
    %1819 = vmatprep.subr.mxu0 0.0
    %1820 = vmatpush1.msra.mxu0 0.0
    %1821 = vmatprep.subr.mxu0 0.0
    %1822 = vmatpush1.msra.mxu0 0.0
    %1823 = vmatprep.subr.mxu0 0.0
    %1824 = vmatpush1.msra.mxu0 0.0
    %1825 = vmatprep.subr.mxu0 0.0
    %1826 = vmatpush1.msra.mxu0 0.0
    %1827 = vmatprep.subr.mxu0 0.0
    %1828 = vmatpush1.msra.mxu0 0.0
    %1829 = vmatprep.subr.mxu0 0.0
    %1830 = vmatpush1.msra.mxu0 0.0
    %1831 = vmatprep.subr.mxu0 0.0
    %1832 = vmatpush1.msra.mxu0 0.0
    %1833 = vmatprep.subr.mxu0 0.0
    %1834 = vmatpush1.msra.mxu0 0.0
    %1835 = vmatprep.subr.mxu0 0.0
    %1836 = vmatpush1.msra.mxu0 0.0
    %1837 = vmatprep.subr.mxu0 0.0
    %1838 = vmatpush1.msra.mxu0 0.0
    %1839 = vmatprep.subr.mxu0 0.0
    %1840 = vmatpush1.msra.mxu0 0.0
    %1841 = vmatprep.subr.mxu0 0.0
    %1842 = vmatpush1.msra.mxu0 0.0
    %1843 = vmatprep.subr.mxu0 0.0
    %1844 = vmatpush1.msra.mxu0 0.0
    %1845 = vmatprep.subr.mxu0 0.0
    %1846 = vmatpush1.msra.mxu0 0.0
    %1847 = vmatprep.mubr.f32.mxu0 0.0
    %1848 = vmatmul.mubr.f32.gmra.mrb[0].mxu0 %v1782
    %v1849 = vpop.f32.mrb[0].mxu0
    %v1850 = vadd.f32 0.0, %v1849
    %v1851 = vpop.f32.mrb[0].mxu0
    %v1852 = vadd.f32 0.0, %v1851
    %1853 = vdwg.mxu0
    %1854 = vmatprep.subr.mxu0 %v532
    %1855 = vmatpush1.msra.mxu0 %v531
    %1856 = vmatprep.subr.mxu0 %v536
    %1857 = vmatpush1.msra.mxu0 %v535
    %1858 = vmatprep.subr.mxu0 %v540
    %1859 = vmatpush1.msra.mxu0 %v539
    %1860 = vmatprep.subr.mxu0 %v544
    %1861 = vmatpush1.msra.mxu0 %v543
    %1862 = vmatprep.subr.mxu0 %v548
    %1863 = vmatpush1.msra.mxu0 %v547
    %1864 = vmatprep.subr.mxu0 %v552
    %1865 = vmatpush1.msra.mxu0 %v551
    %1866 = vmatprep.subr.mxu0 %v556
    %1867 = vmatpush1.msra.mxu0 %v555
    %1868 = vmatprep.subr.mxu0 %v560
    %1869 = vmatpush1.msra.mxu0 %v559
    %1870 = vmatprep.subr.mxu0 %v564
    %1871 = vmatpush1.msra.mxu0 %v563
    %1872 = vmatprep.subr.mxu0 %v568
    %1873 = vmatpush1.msra.mxu0 %v567
    %1874 = vmatprep.subr.mxu0 %v572
    %1875 = vmatpush1.msra.mxu0 %v571
    %1876 = vmatprep.subr.mxu0 %v576
    %1877 = vmatpush1.msra.mxu0 %v575
    %1878 = vmatprep.subr.mxu0 %v580
    %1879 = vmatpush1.msra.mxu0 %v579
    %1880 = vmatprep.subr.mxu0 %v584
    %1881 = vmatpush1.msra.mxu0 %v583
    %1882 = vmatprep.subr.mxu0 %v588
    %1883 = vmatpush1.msra.mxu0 %v587
    %1884 = vmatprep.subr.mxu0 %v592
    %1885 = vmatpush1.msra.mxu0 %v591
    %1886 = vmatprep.subr.mxu0 0.0
    %1887 = vmatpush1.msra.mxu0 0.0
    %1888 = vmatprep.subr.mxu0 0.0
    %1889 = vmatpush1.msra.mxu0 0.0
    %1890 = vmatprep.subr.mxu0 0.0
    %1891 = vmatpush1.msra.mxu0 0.0
    %1892 = vmatprep.subr.mxu0 0.0
    %1893 = vmatpush1.msra.mxu0 0.0
    %1894 = vmatprep.subr.mxu0 0.0
    %1895 = vmatpush1.msra.mxu0 0.0
    %1896 = vmatprep.subr.mxu0 0.0
    %1897 = vmatpush1.msra.mxu0 0.0
    %1898 = vmatprep.subr.mxu0 0.0
    %1899 = vmatpush1.msra.mxu0 0.0
    %1900 = vmatprep.subr.mxu0 0.0
    %1901 = vmatpush1.msra.mxu0 0.0
    %1902 = vmatprep.subr.mxu0 0.0
    %1903 = vmatpush1.msra.mxu0 0.0
    %1904 = vmatprep.subr.mxu0 0.0
    %1905 = vmatpush1.msra.mxu0 0.0
    %1906 = vmatprep.subr.mxu0 0.0
    %1907 = vmatpush1.msra.mxu0 0.0
    %1908 = vmatprep.subr.mxu0 0.0
    %1909 = vmatpush1.msra.mxu0 0.0
    %1910 = vmatprep.subr.mxu0 0.0
    %1911 = vmatpush1.msra.mxu0 0.0
    %1912 = vmatprep.subr.mxu0 0.0
    %1913 = vmatpush1.msra.mxu0 0.0
    %1914 = vmatprep.subr.mxu0 0.0
    %1915 = vmatpush1.msra.mxu0 0.0
    %1916 = vmatprep.subr.mxu0 0.0
    %1917 = vmatpush1.msra.mxu0 0.0
    %1918 = vmatprep.mubr.f32.mxu0 0.0
    %1919 = vmatmul.mubr.f32.gmra.mrb[0].mxu0 %v1782
    %v1920 = vpop.f32.mrb[0].mxu0
    %v1921 = vadd.f32 0.0, %v1920
    %v1922 = vpop.f32.mrb[0].mxu0
    %v1923 = vadd.f32 0.0, %v1922
    %1924 = vdwg.mxu0
    %v1925 = vadd.f32 %v412, %v1850
    %v1926 = vadd.f32 %v414, %v1852
    %v1927 = vadd.f32 %v525, %v1921
    %v1928 = vadd.f32 %v527, %v1923
    %v1929 = vxor.u32 %v1925, 2147483648
    %v1930 = vmul.f32 %v1929, 1.442695
    %v1931 = vpow.pop %v1930
    %v1932 = vadd.f32 %v1931, 1.0
    %v1933 = vrcp.pop %v1932
    %v1934 = vmul.f32 1.0, %v1933
    %v1935 = vxor.u32 %v1926, 2147483648
    %v1936 = vmul.f32 %v1935, 1.442695
    %v1937 = vpow.pop %v1936
    %v1938 = vadd.f32 %v1937, 1.0
    %v1939 = vrcp.pop %v1938
    %v1940 = vmul.f32 1.0, %v1939
    %v1941 = vtanh.pop %v1927
    %v1942 = vxor.u32 %v1928, 2147483648
    %v1943 = vmul.f32 %v1942, 1.442695
    %v1944 = vpow.pop %v1943
    %v1945 = vadd.f32 %v1944, 1.0
    %v1946 = vrcp.pop %v1945
    %v1947 = vmul.f32 1.0, %v1946
    %v1948 = vmul.f32 %v1940, %v1780
    %v1949 = vmul.f32 %v1934, %v1941
    %v1950 = vadd.f32 %v1948, %v1949
    %v1951 = vtanh.pop %v1950
    %v1952 = vmul.f32 %v1947, %v1951
    %v1953 = vld [vmem:[#allocation5] sm:$0xff]
    %v1954 = vld [vmem:[#allocation5 + $0x8] sm:$0xff]
    %v1955 = vld [vmem:[#allocation5 + $0x10] sm:$0xff]
    %v1956 = vld [vmem:[#allocation5 + $0x18] sm:$0xff]
    %v1957 = vld [vmem:[#allocation5 + $0x20] sm:$0xff]
    %v1958 = vld [vmem:[#allocation5 + $0x28] sm:$0xff]
    %v1959 = vld [vmem:[#allocation5 + $0x30] sm:$0xff]
    %v1960 = vld [vmem:[#allocation5 + $0x38] sm:$0xff]
    %v1961 = vld [vmem:[#allocation5 + $0x40] sm:$0xff]
    %v1962 = vld [vmem:[#allocation5 + $0x48] sm:$0xff]
    %v1963 = vld [vmem:[#allocation5 + $0x50] sm:$0xff]
    %v1964 = vld [vmem:[#allocation5 + $0x58] sm:$0xff]
    %v1965 = vld [vmem:[#allocation5 + $0x60] sm:$0xff]
    %v1966 = vld [vmem:[#allocation5 + $0x68] sm:$0xff]
    %v1967 = vld [vmem:[#allocation5 + $0x70] sm:$0xff]
    %v1968 = vld [vmem:[#allocation5 + $0x78] sm:$0xff]
    %v1969 = vld [vmem:[%s6] sm:$0x1]
    %v1971 = vlaneseq
    %v1972 = vshrl.u32 %v1971, 7
    %v1973 = vsub.s32 0, %v1972
    %v1974 = vrot.slane %v1969, %v1973
    %1976 = vmatprep.subr.mxu0 0.0
    %1977 = vmatpush1.msra.mxu0 %v1953
    %1978 = vmatprep.subr.mxu0 0.0
    %1979 = vmatpush1.msra.mxu0 %v1954
    %1980 = vmatprep.subr.mxu0 0.0
    %1981 = vmatpush1.msra.mxu0 %v1955
    %1982 = vmatprep.subr.mxu0 0.0
    %1983 = vmatpush1.msra.mxu0 %v1956
    %1984 = vmatprep.subr.mxu0 0.0
    %1985 = vmatpush1.msra.mxu0 %v1957
    %1986 = vmatprep.subr.mxu0 0.0
    %1987 = vmatpush1.msra.mxu0 %v1958
    %1988 = vmatprep.subr.mxu0 0.0
    %1989 = vmatpush1.msra.mxu0 %v1959
    %1990 = vmatprep.subr.mxu0 0.0
    %1991 = vmatpush1.msra.mxu0 %v1960
    %1992 = vmatprep.subr.mxu0 0.0
    %1993 = vmatpush1.msra.mxu0 %v1961
    %1994 = vmatprep.subr.mxu0 0.0
    %1995 = vmatpush1.msra.mxu0 %v1962
    %1996 = vmatprep.subr.mxu0 0.0
    %1997 = vmatpush1.msra.mxu0 %v1963
    %1998 = vmatprep.subr.mxu0 0.0
    %1999 = vmatpush1.msra.mxu0 %v1964
    %2000 = vmatprep.subr.mxu0 0.0
    %2001 = vmatpush1.msra.mxu0 %v1965
    %2002 = vmatprep.subr.mxu0 0.0
    %2003 = vmatpush1.msra.mxu0 %v1966
    %2004 = vmatprep.subr.mxu0 0.0
    %2005 = vmatpush1.msra.mxu0 %v1967
    %2006 = vmatprep.subr.mxu0 0.0
    %2007 = vmatpush1.msra.mxu0 %v1968
    %2008 = vmatprep.subr.mxu0 0.0
    %2009 = vmatpush1.msra.mxu0 0.0
    %2010 = vmatprep.subr.mxu0 0.0
    %2011 = vmatpush1.msra.mxu0 0.0
    %2012 = vmatprep.subr.mxu0 0.0
    %2013 = vmatpush1.msra.mxu0 0.0
    %2014 = vmatprep.subr.mxu0 0.0
    %2015 = vmatpush1.msra.mxu0 0.0
    %2016 = vmatprep.subr.mxu0 0.0
    %2017 = vmatpush1.msra.mxu0 0.0
    %2018 = vmatprep.subr.mxu0 0.0
    %2019 = vmatpush1.msra.mxu0 0.0
    %2020 = vmatprep.subr.mxu0 0.0
    %2021 = vmatpush1.msra.mxu0 0.0
    %2022 = vmatprep.subr.mxu0 0.0
    %2023 = vmatpush1.msra.mxu0 0.0
    %2024 = vmatprep.subr.mxu0 0.0
    %2025 = vmatpush1.msra.mxu0 0.0
    %2026 = vmatprep.subr.mxu0 0.0
    %2027 = vmatpush1.msra.mxu0 0.0
    %2028 = vmatprep.subr.mxu0 0.0
    %2029 = vmatpush1.msra.mxu0 0.0
    %2030 = vmatprep.subr.mxu0 0.0
    %2031 = vmatpush1.msra.mxu0 0.0
    %2032 = vmatprep.subr.mxu0 0.0
    %2033 = vmatpush1.msra.mxu0 0.0
    %2034 = vmatprep.subr.mxu0 0.0
    %2035 = vmatpush1.msra.mxu0 0.0
    %2036 = vmatprep.subr.mxu0 0.0
    %2037 = vmatpush1.msra.mxu0 0.0
    %2038 = vmatprep.subr.mxu0 0.0
    %2039 = vmatpush1.msra.mxu0 0.0
    %2040 = vmatprep.mubr.f32.mxu0 0.0
    %2041 = vmatmul.mubr.f32.gmra.mrb[0].mxu0 %v1952
    %v2042 = vpop.f32.mrb[0].mxu0
    %v2043 = vadd.f32 %v1974, %v2042
    %v2044 = vpop.f32.mrb[0].mxu0
    %2045 = vdwg.mxu0
    %2046 = vmax.xlane.f32.xlu0 %v2043
    %v2047 = vpop.xlane.xlu0 %2046
    %v2048 = vsub.f32 %v2043, %v2047
    %v2049 = vmul.f32 %v2048, 1.442695
    %v2050 = vpow.pop %v2049
    %2051 = vadd.xlane.f32.xlu0 %v2050
    %v2052 = vpop.xlane.xlu0 %2051
    %v2053 = vrcp.pop %v2052
    %v2054 = vmul.f32 %v2052, %v2053
    %v2055 = vsub.f32 2.0, %v2054
    %v2056 = vmul.f32 %v2053, %v2055
    %v2057 = vmul.f32 %v2050, %v2056
    %2058 = vst [vmem:[#allocation7] sm:$0xff] %v2057
    %2059 = vst [vmem:[#allocation8] sm:$0xff] %v2043
    %2060 = vst [vmem:[#allocation10] sm:$0xff] %v1952
    %2061 = vst [vmem:[#allocation11] sm:$0xff] %v1950
    // Predicated region
    $region38: #{tpu_custom_call.1} parent=1 // pred_check
      _
    $region39: #{tpu_custom_call.1} parent=1 // pred_check_branch
      %2063 = sbr.rel (0) target = $region41
    $region40: #{tpu_custom_call.1} parent=1 // pred_region
      %s2065 = ssub.s32 128, 128
      %2066 = vsyncadd [#allocation4], %s2065
      %s2068 = sshll.u32 [#allocation7], 4
      %s2069 = int_to_ptr.vmem [resolvable:$true] %s2068
      %2071 = dma.vmem_to_hbm [thread:$0]  %s2069, 128, %s7, [#allocation4]
    $region41: #{tpu_custom_call.1} parent=1 // pred_fallthru
      _
    // Predicated region
    $region42: #{tpu_custom_call.1} parent=1 // pred_check
      _
    $region43: #{tpu_custom_call.1} parent=1 // pred_check_branch
      %2073 = sbr.rel (0) target = $region45
    $region44: #{tpu_custom_call.1} parent=1 // pred_region
      %s2075 = ssub.s32 128, 128
      %2076 = vsyncadd [#allocation9], %s2075
      %s2078 = sshll.u32 [#allocation8], 4
      %s2079 = int_to_ptr.vmem [resolvable:$true] %s2078
      %2081 = dma.vmem_to_hbm [thread:$0]  %s2079, 128, %s8, [#allocation9]
    $region45: #{tpu_custom_call.1} parent=1 // pred_fallthru
      _
    // Predicated region
    $region46: #{tpu_custom_call.1} parent=1 // pred_check
      _
    $region47: #{tpu_custom_call.1} parent=1 // pred_check_branch
      %2083 = sbr.rel (0) target = $region49
    $region48: #{tpu_custom_call.1} parent=1 // pred_region
      %s2085 = ssub.s32 128, 128
      %2086 = vsyncadd [#allocation9], %s2085
      %s2088 = sshll.u32 [#allocation10], 4
      %s2089 = int_to_ptr.vmem [resolvable:$true] %s2088
      %2091 = dma.vmem_to_hbm [thread:$0]  %s2089, 128, %s9, [#allocation9]
    $region49: #{tpu_custom_call.1} parent=1 // pred_fallthru
      _
    // Predicated region
    $region50: #{tpu_custom_call.1} parent=1 // pred_check
      _
    $region51: #{tpu_custom_call.1} parent=1 // pred_check_branch
      %2093 = sbr.rel (0) target = $region53
    $region52: #{tpu_custom_call.1} parent=1 // pred_region
      %s2095 = ssub.s32 128, 128
      %2096 = vsyncadd [#allocation12], %s2095
      %s2098 = sshll.u32 [#allocation11], 4
      %s2099 = int_to_ptr.vmem [resolvable:$true] %s2098
      %2101 = dma.vmem_to_hbm [thread:$0]  %s2099, 128, %s10, [#allocation12]
    $region53: #{tpu_custom_call.1} parent=1 // pred_fallthru
      _
    // Predicated region
    $region54: #{tpu_custom_call.1} parent=1 // pred_check
      _
    $region55: #{tpu_custom_call.1} parent=1 // pred_check_branch
      %2103 = sbr.rel (0) target = $region57
    $region56: #{tpu_custom_call.1} parent=1 // pred_region
      %2104 = dma.done [#allocation4], 128
    $region57: #{tpu_custom_call.1} parent=1 // pred_fallthru
      _
    // Predicated region
    $region58: #{tpu_custom_call.1} parent=1 // pred_check
      _
    $region59: #{tpu_custom_call.1} parent=1 // pred_check_branch
      %2106 = sbr.rel (0) target = $region61
    $region60: #{tpu_custom_call.1} parent=1 // pred_region
      %2107 = dma.done [#allocation9], 128
    $region61: #{tpu_custom_call.1} parent=1 // pred_fallthru
      _
    // Predicated region
    $region62: #{tpu_custom_call.1} parent=1 // pred_check
      _
    $region63: #{tpu_custom_call.1} parent=1 // pred_check_branch
      %2109 = sbr.rel (0) target = $region65
    $region64: #{tpu_custom_call.1} parent=1 // pred_region
      %2110 = dma.done [#allocation9], 128
    $region65: #{tpu_custom_call.1} parent=1 // pred_fallthru
      _
    // Predicated region
    $region66: #{tpu_custom_call.1} parent=1 // pred_check
      _
    $region67: #{tpu_custom_call.1} parent=1 // pred_check_branch
      %2112 = sbr.rel (0) target = $region69
    $region68: #{tpu_custom_call.1} parent=1 // pred_region
      %2113 = dma.done [#allocation12], 128
    $region69: #{tpu_custom_call.1} parent=1 // pred_fallthru
      _
    %2114 = vsyncpa [#allocation3], 1
    %2115 = vsyncpa [#allocation6], 1
    %2116 = vsyncpa [#allocation4], 1
    %2117 = vsyncpa [#allocation9], 1
    %2118 = vsyncpa [#allocation12], 1

</llo_original>
